<compile_context>
chip_gen: v7x
topology: tpu7x:2x2x1
jax: 0.10.0
libtpu: 0.0.40
codegen_flags: <defaults>
</compile_context>

<pallas_src>
import functools

import jax
import jax.numpy as jnp
from jax import lax
from jax.experimental import pallas as pl
from jax.experimental.pallas import tpu as pltpu

_LANE = 128
_NEG_SLOPE = 0.2


def _round_up(v, m):
    return (v + m - 1) // m * m


# ---------------------------------------------------------------------------
# Fused forward kernel: one batch element per grid step, everything in VMEM.
# ---------------------------------------------------------------------------
def _fused_disc_kernel(
    # inputs
    x_ref,                                   # (1, L0 + 2, CIP)      f32 (length pre-padded)
    w00_ref, s00_ref, t00_ref,               # (3, CIP, C0P) bf16, (1, C0P) f32 x2
    w01_ref, s01_ref, t01_ref,               # (3, C0P, C0P) bf16, (1, C0P) f32 x2
    w10_ref, s10_ref, t10_ref,               # (3, C0P, C1P) bf16, (1, C1P) f32 x2
    w11_ref, s11_ref, t11_ref,               # (3, C1P, C1P) bf16, (1, C1P) f32 x2
    w1_ref, b1_ref,                          # (L2, C1P, NP) bf16, (1, NP) f32
    w2_ref, b2_ref,                          # (1, NP) f32, (1, 1) f32
    # output
    o_ref,                                   # (1, 1, NP) f32
    # VMEM scratch (channels-last activations, zero rows at both length ends)
    a0_ref,                                  # (L0 + 2, C0P) f32
    a1_ref,                                  # (L1 + 2, C0P) f32
    a2_ref,                                  # (L1 + 2, C1P) f32
    a3_ref,                                  # (L2, C1P)     f32
    *, L0, L1, L2, NP):
    f32 = jnp.float32
    bf16 = jnp.bfloat16

    def lrelu(v):
        return jnp.where(v >= 0, v, _NEG_SLOPE * v)

    def conv_bn_lrelu(tap, w_ref, s_ref, t_ref):
        # out = lrelu((sum_k tap(k) @ w[k]) * scale + shift); f32 accumulation.
        acc = jnp.dot(tap(0).astype(bf16), w_ref[0], preferred_element_type=f32)
        for k in (1, 2):
            acc = acc + jnp.dot(tap(k).astype(bf16), w_ref[k],
                                preferred_element_type=f32)
        return lrelu(acc * s_ref[...] + t_ref[...])

    def store_padded(dst_ref, y, length):
        # Interior rows [1, length + 1) hold the activation; rows 0 and
        # length + 1 are the zero padding consumed by the next conv's taps.
        ch = y.shape[-1]
        dst_ref[0:1, :] = jnp.zeros((1, ch), f32)
        dst_ref[length + 1:length + 2, :] = jnp.zeros((1, ch), f32)
        dst_ref[1:length + 1, :] = y

    # ---- conv0_0 (stride 1, bias) : x already zero padded along length -------
    x = x_ref[0]                                               # (L0 + 2, CIP)
    y = conv_bn_lrelu(lambda k: x[k:k + L0, :], w00_ref, s00_ref, t00_ref)
    store_padded(a0_ref, y, L0)

    # ---- conv0_1 (stride 2) + bn0_1 ------------------------------------------
    y = conv_bn_lrelu(lambda k: a0_ref[pl.ds(k, L1, 2), :],
                      w01_ref, s01_ref, t01_ref)
    store_padded(a1_ref, y, L1)

    # ---- conv1_0 (stride 1) + bn1_0 ------------------------------------------
    y = conv_bn_lrelu(lambda k: a1_ref[k:k + L1, :], w10_ref, s10_ref, t10_ref)
    store_padded(a2_ref, y, L1)

    # ---- conv1_1 (stride 2) + bn1_1 ------------------------------------------
    a3_ref[...] = conv_bn_lrelu(lambda k: a2_ref[pl.ds(k, L2, 2), :],
                                w11_ref, s11_ref, t11_ref)

    # ---- linear1 + lrelu : contract (position, channel) against the reordered
    #      weight row by row — no giant flatten of the activation needed. -------
    h = jnp.zeros((1, NP), f32)
    if L2 <= 32:                       # small static trip count: unroll
        for l in range(L2):
            h = h + jnp.dot(a3_ref[l:l + 1, :].astype(bf16), w1_ref[l],
                            preferred_element_type=f32)
    else:                              # real-size shapes: rolled loop
        def body(l, acc):
            return acc + jnp.dot(a3_ref[pl.ds(l, 1), :].astype(bf16), w1_ref[l],
                                 preferred_element_type=f32)
        h = lax.fori_loop(0, L2, body, h)
    h = lrelu(h + b1_ref[...])

    # ---- linear2 folded in as a VPU reduction (N=1 matmul not worth the MXU) --
    total = jnp.sum(h * w2_ref[...], axis=1, keepdims=True) + b2_ref[...]  # (1,1)
    o_ref[0] = jnp.broadcast_to(total, (1, NP))


# ---------------------------------------------------------------------------
# Parameter folding / packing (plain JAX, runs once per call at the boundary)
# ---------------------------------------------------------------------------
def _fold_bn(bn, eps=1e-5):
    scale = bn["gamma"] / jnp.sqrt(bn["var"] + eps)
    shift = bn["beta"] - bn["mean"] * scale
    return scale, shift


def _pad_row(v, n):
    """1-D (c,) -> (1, n) f32, zero padded."""
    v = v.astype(jnp.float32)
    return jnp.pad(v, (0, n - v.shape[0])).reshape(1, n)


def _prep_conv_w(w, cin_p, cout_p):
    """torch Conv1d weight (Cout, Cin, 3) -> (3, cin_p, cout_p) bf16."""
    cout, cin, _ = w.shape
    wt = jnp.transpose(w, (2, 1, 0))
    wt = jnp.pad(wt, ((0, 0), (0, cin_p - cin), (0, cout_p - cout)))
    return wt.astype(jnp.bfloat16)


# ---------------------------------------------------------------------------
# Forward pass (single fused pallas_call)
# ---------------------------------------------------------------------------
def vgg_style_discriminator_1d(x, params, input_size):
    assert x.shape[2] == input_size, (
        f"Input size must be identical to input_size, but received {x.shape}.")
    B, Cin, L0 = x.shape
    nf = params["w00"].shape[0]                 # num_feat
    c1 = params["w10"].shape[0]                 # 2 * num_feat
    n_hidden = params["lin1_w"].shape[0]        # 100

    L1 = (L0 - 1) // 2 + 1                      # after conv0_1 (stride 2, pad 1, k 3)
    L2 = (L1 - 1) // 2 + 1                      # after conv1_1
    assert params["lin1_w"].shape[1] == c1 * L2

    CIP = _round_up(Cin, _LANE)                 # lane-padded channel widths
    C0P = _round_up(nf, _LANE)
    C1P = _round_up(c1, _LANE)
    NP = _round_up(n_hidden, _LANE)

    # Network-boundary layout conversion: NCW -> channels-last, with conv zero
    # padding and lane padding folded in (done exactly once).
    x_nlc = jnp.pad(jnp.transpose(x, (0, 2, 1)).astype(jnp.float32),
                    ((0, 0), (1, 1), (0, CIP - Cin)))

    # Fold bias / BatchNorm(eval) into per-channel scale & shift; bf16 weights.
    w00 = _prep_conv_w(params["w00"], CIP, C0P)
    s00 = _pad_row(jnp.ones((nf,), jnp.float32), C0P)
    t00 = _pad_row(params["b00"], C0P)
    sc, sh = _fold_bn(params["bn01"])
    w01, s01, t01 = _prep_conv_w(params["w01"], C0P, C0P), _pad_row(sc, C0P), _pad_row(sh, C0P)
    sc, sh = _fold_bn(params["bn10"])
    w10, s10, t10 = _prep_conv_w(params["w10"], C0P, C1P), _pad_row(sc, C1P), _pad_row(sh, C1P)
    sc, sh = _fold_bn(params["bn11"])
    w11, s11, t11 = _prep_conv_w(params["w11"], C1P, C1P), _pad_row(sc, C1P), _pad_row(sh, C1P)

    # linear1: (n_hidden, c1*L2) with torch channel-major flatten order
    # -> (L2, C1P, NP) so the kernel walks the channels-last activation directly.
    w1 = params["lin1_w"].reshape(n_hidden, c1, L2)
    w1 = jnp.transpose(w1, (2, 1, 0))
    w1 = jnp.pad(w1, ((0, 0), (0, C1P - c1), (0, NP - n_hidden))).astype(jnp.bfloat16)
    b1 = _pad_row(params["lin1_b"], NP)
    w2 = jnp.pad(params["lin2_w"].astype(jnp.float32), ((0, 0), (0, NP - n_hidden)))
    b2 = params["lin2_b"].astype(jnp.float32).reshape(1, 1)

    inputs = (x_nlc, w00, s00, t00, w01, s01, t01, w10, s10, t10,
              w11, s11, t11, w1, b1, w2, b2)

    def const_spec(shape):
        rank = len(shape)

        def imap(b):
            return (0,) * rank

        return pl.BlockSpec(shape, imap)

    in_specs = [pl.BlockSpec((1, L0 + 2, CIP), lambda b: (b, 0, 0))]
    in_specs += [const_spec(tuple(a.shape)) for a in inputs[1:]]
    out_specs = pl.BlockSpec((1, 1, NP), lambda b: (b, 0, 0))

    scratch_shapes = [
        pltpu.VMEM((L0 + 2, C0P), jnp.float32),
        pltpu.VMEM((L1 + 2, C0P), jnp.float32),
        pltpu.VMEM((L1 + 2, C1P), jnp.float32),
        pltpu.VMEM((L2, C1P), jnp.float32),
    ]

    flops = 2 * B * (L0 * 3 * CIP * C0P + L1 * 3 * C0P * C0P
                     + L1 * 3 * C0P * C1P + L2 * 3 * C1P * C1P
                     + L2 * C1P * NP + NP)
    bytes_accessed = sum(int(a.size) * a.dtype.itemsize for a in inputs) + B * NP * 4
    cost = pl.CostEstimate(flops=int(flops), transcendentals=0,
                           bytes_accessed=int(bytes_accessed))

    kern = functools.partial(_fused_disc_kernel, L0=L0, L1=L1, L2=L2, NP=NP)

    out = pl.pallas_call(
        kern,
        out_shape=jax.ShapeDtypeStruct((B, 1, NP), jnp.float32),
        grid_spec=pltpu.PrefetchScalarGridSpec(
            num_scalar_prefetch=0,
            grid=(B,),
            in_specs=in_specs,
            out_specs=out_specs,
            scratch_shapes=scratch_shapes),
        compiler_params=pltpu.CompilerParams(
            dimension_semantics=("parallel",)),
        cost_estimate=cost,
    )(*inputs)
    return out[:, 0, :1]


# ---------------------------------------------------------------------------
# Parameters (deterministic synthetic init)
# ---------------------------------------------------------------------------
def init_params(key, num_in_ch, num_feat, lin1_in):
    ks = jax.random.split(key, 16)
    n = iter(range(16))

    def w(k, shape, s=0.1):
        return s * jax.random.normal(k, shape, jnp.float32)

    def bn(k, c):
        k1, k2, k3, k4 = jax.random.split(k, 4)
        return {
            "gamma": 1.0 + 0.1 * jax.random.normal(k1, (c,), jnp.float32),
            "beta": 0.1 * jax.random.normal(k2, (c,), jnp.float32),
            "mean": 0.1 * jax.random.normal(k3, (c,), jnp.float32),
            "var": 0.5 + 0.5 * jnp.abs(jax.random.normal(k4, (c,), jnp.float32)),
        }

    nf = num_feat
    return {
        "w00": w(ks[next(n)], (nf, num_in_ch, 3)),
        "b00": w(ks[next(n)], (nf,), 0.05),
        "w01": w(ks[next(n)], (nf, nf, 3)),
        "bn01": bn(ks[next(n)], nf),
        "w10": w(ks[next(n)], (2 * nf, nf, 3)),
        "bn10": bn(ks[next(n)], 2 * nf),
        "w11": w(ks[next(n)], (2 * nf, 2 * nf, 3)),
        "bn11": bn(ks[next(n)], 2 * nf),
        # Original module uses Linear(27008, 100) (num_feat=64, input_size=841);
        # here in_features is derived from the small demo shapes.
        "lin1_w": w(ks[next(n)], (100, lin1_in), 0.05),
        "lin1_b": w(ks[next(n)], (100,), 0.05),
        "lin2_w": w(ks[next(n)], (1, 100), 0.05),
        "lin2_b": w(ks[next(n)], (1,), 0.05),
    }


# ---------------------------------------------------------------------------
# Pure-JAX reference (correctness check only)
# ---------------------------------------------------------------------------
def _ref_forward(x, params):
    def conv(v, w, stride):
        return jax.lax.conv_general_dilated(
            v, w, window_strides=(stride,), padding=((1, 1),),
            dimension_numbers=("NCH", "OIH", "NCH"))

    def lrelu(v):
        return jnp.where(v >= 0, v, _NEG_SLOPE * v)

    def bn(v, p, eps=1e-5):
        s = p["gamma"] / jnp.sqrt(p["var"] + eps)
        t = p["beta"] - p["mean"] * s
        return v * s[None, :, None] + t[None, :, None]

    f = lrelu(conv(x, params["w00"], 1) + params["b00"][None, :, None])
    f = lrelu(bn(conv(f, params["w01"], 2), params["bn01"]))
    f = lrelu(bn(conv(f, params["w10"], 1), params["bn10"]))
    f = lrelu(bn(conv(f, params["w11"], 2), params["bn11"]))
    f = f.reshape(f.shape[0], -1)
    f = lrelu(f @ params["lin1_w"].T + params["lin1_b"])
    return f @ params["lin2_w"].T + params["lin2_b"]


# ---------------------------------------------------------------------------
if __name__ == "__main__":
    B, num_in_ch, num_feat, input_size = 2, 4, 8, 16

    # spatial sizes: 16 -> conv0_1(s=2) -> 8 -> conv1_1(s=2) -> 4
    l1 = (input_size - 1) // 2 + 1
    l2 = (l1 - 1) // 2 + 1
    lin1_in = 2 * num_feat * l2                  # = 64 for the demo shapes

    key = jax.random.PRNGKey(0)
    kx, kp = jax.random.split(key)
    x = jax.random.normal(kx, (B, num_in_ch, input_size), jnp.float32)
    params = init_params(kp, num_in_ch, num_feat, lin1_in)

    fwd = jax.jit(functools.partial(vgg_style_discriminator_1d,
                                    input_size=input_size))
    out = jax.block_until_ready(fwd(x, params))

    ref = _ref_forward(x, params)
    assert out.shape == (B, 1), out.shape
    assert jnp.allclose(out, ref, rtol=3e-2, atol=3e-2), (out, ref)

    print("KERNEL_OK")
</pallas_src>

<mosaic_0001>
module attributes {stable_mosaic.version = 11 : i64} {
  func.func @_fused_disc_kernel(%arg0: i32, %arg1: memref<1x18x128xf32, #tpu.memory_space<vmem>>, %arg2: memref<3x128x128xbf16, #tpu.memory_space<vmem>>, %arg3: memref<1x128xf32, #tpu.memory_space<vmem>>, %arg4: memref<1x128xf32, #tpu.memory_space<vmem>>, %arg5: memref<3x128x128xbf16, #tpu.memory_space<vmem>>, %arg6: memref<1x128xf32, #tpu.memory_space<vmem>>, %arg7: memref<1x128xf32, #tpu.memory_space<vmem>>, %arg8: memref<3x128x128xbf16, #tpu.memory_space<vmem>>, %arg9: memref<1x128xf32, #tpu.memory_space<vmem>>, %arg10: memref<1x128xf32, #tpu.memory_space<vmem>>, %arg11: memref<3x128x128xbf16, #tpu.memory_space<vmem>>, %arg12: memref<1x128xf32, #tpu.memory_space<vmem>>, %arg13: memref<1x128xf32, #tpu.memory_space<vmem>>, %arg14: memref<4x128x128xbf16, #tpu.memory_space<vmem>>, %arg15: memref<1x128xf32, #tpu.memory_space<vmem>>, %arg16: memref<1x128xf32, #tpu.memory_space<vmem>>, %arg17: memref<1x1xf32, #tpu.memory_space<vmem>>, %arg18: memref<1x1x128xf32, #tpu.memory_space<vmem>>, %arg19: memref<18x128xf32, #tpu.memory_space<vmem>>, %arg20: memref<10x128xf32, #tpu.memory_space<vmem>>, %arg21: memref<10x128xf32, #tpu.memory_space<vmem>>, %arg22: memref<4x128xf32, #tpu.memory_space<vmem>>) attributes {dimension_semantics = [#tpu.dimension_semantics<parallel>], iteration_bounds = array<i64: 2>, scalar_prefetch = 0 : i64, scratch_operands = 4 : i64, tpu.core_type = #tpu.core_type<tc>, window_params = [{transform_indices = @transform_0, window_bounds = array<i64: 1, 18, 128>}, {pipeline_mode = #tpu.pipeline_mode<synchronous>, transform_indices = @transform_1, window_bounds = array<i64: 3, 128, 128>}, {pipeline_mode = #tpu.pipeline_mode<synchronous>, transform_indices = @transform_2, window_bounds = array<i64: 1, 128>}, {pipeline_mode = #tpu.pipeline_mode<synchronous>, transform_indices = @transform_3, window_bounds = array<i64: 1, 128>}, {pipeline_mode = #tpu.pipeline_mode<synchronous>, transform_indices = @transform_4, window_bounds = array<i64: 3, 128, 128>}, {pipeline_mode = #tpu.pipeline_mode<synchronous>, transform_indices = @transform_5, window_bounds = array<i64: 1, 128>}, {pipeline_mode = #tpu.pipeline_mode<synchronous>, transform_indices = @transform_6, window_bounds = array<i64: 1, 128>}, {pipeline_mode = #tpu.pipeline_mode<synchronous>, transform_indices = @transform_7, window_bounds = array<i64: 3, 128, 128>}, {pipeline_mode = #tpu.pipeline_mode<synchronous>, transform_indices = @transform_8, window_bounds = array<i64: 1, 128>}, {pipeline_mode = #tpu.pipeline_mode<synchronous>, transform_indices = @transform_9, window_bounds = array<i64: 1, 128>}, {pipeline_mode = #tpu.pipeline_mode<synchronous>, transform_indices = @transform_10, window_bounds = array<i64: 3, 128, 128>}, {pipeline_mode = #tpu.pipeline_mode<synchronous>, transform_indices = @transform_11, window_bounds = array<i64: 1, 128>}, {pipeline_mode = #tpu.pipeline_mode<synchronous>, transform_indices = @transform_12, window_bounds = array<i64: 1, 128>}, {pipeline_mode = #tpu.pipeline_mode<synchronous>, transform_indices = @transform_13, window_bounds = array<i64: 4, 128, 128>}, {pipeline_mode = #tpu.pipeline_mode<synchronous>, transform_indices = @transform_14, window_bounds = array<i64: 1, 128>}, {pipeline_mode = #tpu.pipeline_mode<synchronous>, transform_indices = @transform_15, window_bounds = array<i64: 1, 128>}, {pipeline_mode = #tpu.pipeline_mode<synchronous>, transform_indices = @transform_16, window_bounds = array<i64: 1, 1>}, {transform_indices = @transform_17, window_bounds = array<i64: 1, 1, 128>}]} {
    %c0 = arith.constant 0 : index
    %c0_0 = arith.constant 0 : index
    %c0_1 = arith.constant 0 : index
    %0 = vector.load %arg1[%c0, %c0_0, %c0_1] : memref<1x18x128xf32, #tpu.memory_space<vmem>>, vector<1x18x128xf32>
    %1 = vector.shape_cast %0 : vector<1x18x128xf32> to vector<18x128xf32>
    %2 = vector.extract_strided_slice %1 {offsets = [0, 0], sizes = [16, 128], strides = [1, 1]} : vector<18x128xf32> to vector<16x128xf32>
    %3 = arith.truncf %2 : vector<16x128xf32> to vector<16x128xbf16>
    %c0_2 = arith.constant 0 : index
    %c0_3 = arith.constant 0 : index
    %c0_4 = arith.constant 0 : index
    %4 = vector.load %arg2[%c0_2, %c0_3, %c0_4] : memref<3x128x128xbf16, #tpu.memory_space<vmem>>, vector<1x128x128xbf16>
    %5 = vector.shape_cast %4 : vector<1x128x128xbf16> to vector<128x128xbf16>
    %cst = arith.constant dense<0.000000e+00> : vector<16x128xf32>
    %6 = tpu.matmul %3, %5, %cst {dimension_numbers = #tpu.dot_dimension_numbers<[1], [0], [0], [1], [0, 0, 1, 1], [], []>} : vector<16x128xbf16>, vector<128x128xbf16>, vector<16x128xf32> -> vector<16x128xf32>
    %7 = vector.extract_strided_slice %1 {offsets = [1, 0], sizes = [16, 128], strides = [1, 1]} : vector<18x128xf32> to vector<16x128xf32>
    %8 = arith.truncf %7 : vector<16x128xf32> to vector<16x128xbf16>
    %c1 = arith.constant 1 : index
    %c0_5 = arith.constant 0 : index
    %c0_6 = arith.constant 0 : index
    %9 = vector.load %arg2[%c1, %c0_5, %c0_6] : memref<3x128x128xbf16, #tpu.memory_space<vmem>>, vector<1x128x128xbf16>
    %10 = vector.shape_cast %9 : vector<1x128x128xbf16> to vector<128x128xbf16>
    %cst_7 = arith.constant dense<0.000000e+00> : vector<16x128xf32>
    %11 = tpu.matmul %8, %10, %cst_7 {dimension_numbers = #tpu.dot_dimension_numbers<[1], [0], [0], [1], [0, 0, 1, 1], [], []>} : vector<16x128xbf16>, vector<128x128xbf16>, vector<16x128xf32> -> vector<16x128xf32>
    %12 = arith.addf %6, %11 : vector<16x128xf32>
    %13 = vector.extract_strided_slice %1 {offsets = [2, 0], sizes = [16, 128], strides = [1, 1]} : vector<18x128xf32> to vector<16x128xf32>
    %14 = arith.truncf %13 : vector<16x128xf32> to vector<16x128xbf16>
    %c2 = arith.constant 2 : index
    %c0_8 = arith.constant 0 : index
    %c0_9 = arith.constant 0 : index
    %15 = vector.load %arg2[%c2, %c0_8, %c0_9] : memref<3x128x128xbf16, #tpu.memory_space<vmem>>, vector<1x128x128xbf16>
    %16 = vector.shape_cast %15 : vector<1x128x128xbf16> to vector<128x128xbf16>
    %cst_10 = arith.constant dense<0.000000e+00> : vector<16x128xf32>
    %17 = tpu.matmul %14, %16, %cst_10 {dimension_numbers = #tpu.dot_dimension_numbers<[1], [0], [0], [1], [0, 0, 1, 1], [], []>} : vector<16x128xbf16>, vector<128x128xbf16>, vector<16x128xf32> -> vector<16x128xf32>
    %18 = arith.addf %12, %17 : vector<16x128xf32>
    %c0_11 = arith.constant 0 : index
    %c0_12 = arith.constant 0 : index
    %19 = vector.load %arg3[%c0_11, %c0_12] : memref<1x128xf32, #tpu.memory_space<vmem>>, vector<1x128xf32>
    %20 = vector.broadcast %19 : vector<1x128xf32> to vector<16x128xf32>
    %21 = arith.mulf %18, %20 : vector<16x128xf32>
    %c0_13 = arith.constant 0 : index
    %c0_14 = arith.constant 0 : index
    %22 = vector.load %arg4[%c0_13, %c0_14] : memref<1x128xf32, #tpu.memory_space<vmem>>, vector<1x128xf32>
    %23 = vector.broadcast %22 : vector<1x128xf32> to vector<16x128xf32>
    %24 = arith.addf %21, %23 : vector<16x128xf32>
    %cst_15 = arith.constant 0.000000e+00 : f32
    %25 = vector.broadcast %cst_15 : f32 to vector<16x128xf32>
    %26 = arith.cmpf oge, %24, %25 : vector<16x128xf32>
    %cst_16 = arith.constant 2.000000e-01 : f32
    %27 = vector.broadcast %cst_16 : f32 to vector<16x128xf32>
    %28 = arith.mulf %27, %24 : vector<16x128xf32>
    %29 = arith.select %26, %24, %28 : vector<16x128xi1>, vector<16x128xf32>
    %cst_17 = arith.constant 0.000000e+00 : f32
    %30 = vector.broadcast %cst_17 : f32 to vector<1x128xf32>
    %c0_18 = arith.constant 0 : index
    %c0_19 = arith.constant 0 : index
    %31 = vector.load %arg19[%c0_18, %c0_19] : memref<18x128xf32, #tpu.memory_space<vmem>>, vector<1x128xf32>
    tpu.vector_store %arg19[%c0_18, %c0_19], %30 {strides = array<i32>} : memref<18x128xf32, #tpu.memory_space<vmem>>, vector<1x128xf32>,
    %cst_20 = arith.constant 0.000000e+00 : f32
    %32 = vector.broadcast %cst_20 : f32 to vector<1x128xf32>
    %c17 = arith.constant 17 : index
    %c0_21 = arith.constant 0 : index
    %33 = vector.load %arg19[%c17, %c0_21] : memref<18x128xf32, #tpu.memory_space<vmem>>, vector<1x128xf32>
    tpu.vector_store %arg19[%c17, %c0_21], %32 {strides = array<i32>} : memref<18x128xf32, #tpu.memory_space<vmem>>, vector<1x128xf32>,
    %c1_22 = arith.constant 1 : index
    %c0_23 = arith.constant 0 : index
    %34 = vector.load %arg19[%c1_22, %c0_23] : memref<18x128xf32, #tpu.memory_space<vmem>>, vector<16x128xf32>
    tpu.vector_store %arg19[%c1_22, %c0_23], %29 {strides = array<i32>} : memref<18x128xf32, #tpu.memory_space<vmem>>, vector<16x128xf32>,
    %c0_24 = arith.constant 0 : index
    %c0_25 = arith.constant 0 : index
    %35 = tpu.strided_load %arg19[%c0_24, %c0_25] {strides = array<i32: 2, 1>} : memref<18x128xf32, #tpu.memory_space<vmem>>, vector<8x128xf32>
    %36 = arith.truncf %35 : vector<8x128xf32> to vector<8x128xbf16>
    %c0_26 = arith.constant 0 : index
    %c0_27 = arith.constant 0 : index
    %c0_28 = arith.constant 0 : index
    %37 = vector.load %arg5[%c0_26, %c0_27, %c0_28] : memref<3x128x128xbf16, #tpu.memory_space<vmem>>, vector<1x128x128xbf16>
    %38 = vector.shape_cast %37 : vector<1x128x128xbf16> to vector<128x128xbf16>
    %cst_29 = arith.constant dense<0.000000e+00> : vector<8x128xf32>
    %39 = tpu.matmul %36, %38, %cst_29 {dimension_numbers = #tpu.dot_dimension_numbers<[1], [0], [0], [1], [0, 0, 1, 1], [], []>} : vector<8x128xbf16>, vector<128x128xbf16>, vector<8x128xf32> -> vector<8x128xf32>
    %c1_30 = arith.constant 1 : index
    %c0_31 = arith.constant 0 : index
    %40 = tpu.strided_load %arg19[%c1_30, %c0_31] {strides = array<i32: 2, 1>} : memref<18x128xf32, #tpu.memory_space<vmem>>, vector<8x128xf32>
    %41 = arith.truncf %40 : vector<8x128xf32> to vector<8x128xbf16>
    %c1_32 = arith.constant 1 : index
    %c0_33 = arith.constant 0 : index
    %c0_34 = arith.constant 0 : index
    %42 = vector.load %arg5[%c1_32, %c0_33, %c0_34] : memref<3x128x128xbf16, #tpu.memory_space<vmem>>, vector<1x128x128xbf16>
    %43 = vector.shape_cast %42 : vector<1x128x128xbf16> to vector<128x128xbf16>
    %cst_35 = arith.constant dense<0.000000e+00> : vector<8x128xf32>
    %44 = tpu.matmul %41, %43, %cst_35 {dimension_numbers = #tpu.dot_dimension_numbers<[1], [0], [0], [1], [0, 0, 1, 1], [], []>} : vector<8x128xbf16>, vector<128x128xbf16>, vector<8x128xf32> -> vector<8x128xf32>
    %45 = arith.addf %39, %44 : vector<8x128xf32>
    %c2_36 = arith.constant 2 : index
    %c0_37 = arith.constant 0 : index
    %46 = tpu.strided_load %arg19[%c2_36, %c0_37] {strides = array<i32: 2, 1>} : memref<18x128xf32, #tpu.memory_space<vmem>>, vector<8x128xf32>
    %47 = arith.truncf %46 : vector<8x128xf32> to vector<8x128xbf16>
    %c2_38 = arith.constant 2 : index
    %c0_39 = arith.constant 0 : index
    %c0_40 = arith.constant 0 : index
    %48 = vector.load %arg5[%c2_38, %c0_39, %c0_40] : memref<3x128x128xbf16, #tpu.memory_space<vmem>>, vector<1x128x128xbf16>
    %49 = vector.shape_cast %48 : vector<1x128x128xbf16> to vector<128x128xbf16>
    %cst_41 = arith.constant dense<0.000000e+00> : vector<8x128xf32>
    %50 = tpu.matmul %47, %49, %cst_41 {dimension_numbers = #tpu.dot_dimension_numbers<[1], [0], [0], [1], [0, 0, 1, 1], [], []>} : vector<8x128xbf16>, vector<128x128xbf16>, vector<8x128xf32> -> vector<8x128xf32>
    %51 = arith.addf %45, %50 : vector<8x128xf32>
    %c0_42 = arith.constant 0 : index
    %c0_43 = arith.constant 0 : index
    %52 = vector.load %arg6[%c0_42, %c0_43] : memref<1x128xf32, #tpu.memory_space<vmem>>, vector<1x128xf32>
    %53 = vector.broadcast %52 : vector<1x128xf32> to vector<8x128xf32>
    %54 = arith.mulf %51, %53 : vector<8x128xf32>
    %c0_44 = arith.constant 0 : index
    %c0_45 = arith.constant 0 : index
    %55 = vector.load %arg7[%c0_44, %c0_45] : memref<1x128xf32, #tpu.memory_space<vmem>>, vector<1x128xf32>
    %56 = vector.broadcast %55 : vector<1x128xf32> to vector<8x128xf32>
    %57 = arith.addf %54, %56 : vector<8x128xf32>
    %cst_46 = arith.constant 0.000000e+00 : f32
    %58 = vector.broadcast %cst_46 : f32 to vector<8x128xf32>
    %59 = arith.cmpf oge, %57, %58 : vector<8x128xf32>
    %cst_47 = arith.constant 2.000000e-01 : f32
    %60 = vector.broadcast %cst_47 : f32 to vector<8x128xf32>
    %61 = arith.mulf %60, %57 : vector<8x128xf32>
    %62 = arith.select %59, %57, %61 : vector<8x128xi1>, vector<8x128xf32>
    %cst_48 = arith.constant 0.000000e+00 : f32
    %63 = vector.broadcast %cst_48 : f32 to vector<1x128xf32>
    %c0_49 = arith.constant 0 : index
    %c0_50 = arith.constant 0 : index
    %64 = vector.load %arg20[%c0_49, %c0_50] : memref<10x128xf32, #tpu.memory_space<vmem>>, vector<1x128xf32>
    tpu.vector_store %arg20[%c0_49, %c0_50], %63 {strides = array<i32>} : memref<10x128xf32, #tpu.memory_space<vmem>>, vector<1x128xf32>,
    %cst_51 = arith.constant 0.000000e+00 : f32
    %65 = vector.broadcast %cst_51 : f32 to vector<1x128xf32>
    %c9 = arith.constant 9 : index
    %c0_52 = arith.constant 0 : index
    %66 = vector.load %arg20[%c9, %c0_52] : memref<10x128xf32, #tpu.memory_space<vmem>>, vector<1x128xf32>
    tpu.vector_store %arg20[%c9, %c0_52], %65 {strides = array<i32>} : memref<10x128xf32, #tpu.memory_space<vmem>>, vector<1x128xf32>,
    %c1_53 = arith.constant 1 : index
    %c0_54 = arith.constant 0 : index
    %67 = vector.load %arg20[%c1_53, %c0_54] : memref<10x128xf32, #tpu.memory_space<vmem>>, vector<8x128xf32>
    tpu.vector_store %arg20[%c1_53, %c0_54], %62 {strides = array<i32>} : memref<10x128xf32, #tpu.memory_space<vmem>>, vector<8x128xf32>,
    %c0_55 = arith.constant 0 : index
    %c0_56 = arith.constant 0 : index
    %68 = vector.load %arg20[%c0_55, %c0_56] : memref<10x128xf32, #tpu.memory_space<vmem>>, vector<8x128xf32>
    %69 = arith.truncf %68 : vector<8x128xf32> to vector<8x128xbf16>
    %c0_57 = arith.constant 0 : index
    %c0_58 = arith.constant 0 : index
    %c0_59 = arith.constant 0 : index
    %70 = vector.load %arg8[%c0_57, %c0_58, %c0_59] : memref<3x128x128xbf16, #tpu.memory_space<vmem>>, vector<1x128x128xbf16>
    %71 = vector.shape_cast %70 : vector<1x128x128xbf16> to vector<128x128xbf16>
    %cst_60 = arith.constant dense<0.000000e+00> : vector<8x128xf32>
    %72 = tpu.matmul %69, %71, %cst_60 {dimension_numbers = #tpu.dot_dimension_numbers<[1], [0], [0], [1], [0, 0, 1, 1], [], []>} : vector<8x128xbf16>, vector<128x128xbf16>, vector<8x128xf32> -> vector<8x128xf32>
    %c1_61 = arith.constant 1 : index
    %c0_62 = arith.constant 0 : index
    %73 = vector.load %arg20[%c1_61, %c0_62] : memref<10x128xf32, #tpu.memory_space<vmem>>, vector<8x128xf32>
    %74 = arith.truncf %73 : vector<8x128xf32> to vector<8x128xbf16>
    %c1_63 = arith.constant 1 : index
    %c0_64 = arith.constant 0 : index
    %c0_65 = arith.constant 0 : index
    %75 = vector.load %arg8[%c1_63, %c0_64, %c0_65] : memref<3x128x128xbf16, #tpu.memory_space<vmem>>, vector<1x128x128xbf16>
    %76 = vector.shape_cast %75 : vector<1x128x128xbf16> to vector<128x128xbf16>
    %cst_66 = arith.constant dense<0.000000e+00> : vector<8x128xf32>
    %77 = tpu.matmul %74, %76, %cst_66 {dimension_numbers = #tpu.dot_dimension_numbers<[1], [0], [0], [1], [0, 0, 1, 1], [], []>} : vector<8x128xbf16>, vector<128x128xbf16>, vector<8x128xf32> -> vector<8x128xf32>
    %78 = arith.addf %72, %77 : vector<8x128xf32>
    %c2_67 = arith.constant 2 : index
    %c0_68 = arith.constant 0 : index
    %79 = vector.load %arg20[%c2_67, %c0_68] : memref<10x128xf32, #tpu.memory_space<vmem>>, vector<8x128xf32>
    %80 = arith.truncf %79 : vector<8x128xf32> to vector<8x128xbf16>
    %c2_69 = arith.constant 2 : index
    %c0_70 = arith.constant 0 : index
    %c0_71 = arith.constant 0 : index
    %81 = vector.load %arg8[%c2_69, %c0_70, %c0_71] : memref<3x128x128xbf16, #tpu.memory_space<vmem>>, vector<1x128x128xbf16>
    %82 = vector.shape_cast %81 : vector<1x128x128xbf16> to vector<128x128xbf16>
    %cst_72 = arith.constant dense<0.000000e+00> : vector<8x128xf32>
    %83 = tpu.matmul %80, %82, %cst_72 {dimension_numbers = #tpu.dot_dimension_numbers<[1], [0], [0], [1], [0, 0, 1, 1], [], []>} : vector<8x128xbf16>, vector<128x128xbf16>, vector<8x128xf32> -> vector<8x128xf32>
    %84 = arith.addf %78, %83 : vector<8x128xf32>
    %c0_73 = arith.constant 0 : index
    %c0_74 = arith.constant 0 : index
    %85 = vector.load %arg9[%c0_73, %c0_74] : memref<1x128xf32, #tpu.memory_space<vmem>>, vector<1x128xf32>
    %86 = vector.broadcast %85 : vector<1x128xf32> to vector<8x128xf32>
    %87 = arith.mulf %84, %86 : vector<8x128xf32>
    %c0_75 = arith.constant 0 : index
    %c0_76 = arith.constant 0 : index
    %88 = vector.load %arg10[%c0_75, %c0_76] : memref<1x128xf32, #tpu.memory_space<vmem>>, vector<1x128xf32>
    %89 = vector.broadcast %88 : vector<1x128xf32> to vector<8x128xf32>
    %90 = arith.addf %87, %89 : vector<8x128xf32>
    %cst_77 = arith.constant 0.000000e+00 : f32
    %91 = vector.broadcast %cst_77 : f32 to vector<8x128xf32>
    %92 = arith.cmpf oge, %90, %91 : vector<8x128xf32>
    %cst_78 = arith.constant 2.000000e-01 : f32
    %93 = vector.broadcast %cst_78 : f32 to vector<8x128xf32>
    %94 = arith.mulf %93, %90 : vector<8x128xf32>
    %95 = arith.select %92, %90, %94 : vector<8x128xi1>, vector<8x128xf32>
    %cst_79 = arith.constant 0.000000e+00 : f32
    %96 = vector.broadcast %cst_79 : f32 to vector<1x128xf32>
    %c0_80 = arith.constant 0 : index
    %c0_81 = arith.constant 0 : index
    %97 = vector.load %arg21[%c0_80, %c0_81] : memref<10x128xf32, #tpu.memory_space<vmem>>, vector<1x128xf32>
    tpu.vector_store %arg21[%c0_80, %c0_81], %96 {strides = array<i32>} : memref<10x128xf32, #tpu.memory_space<vmem>>, vector<1x128xf32>,
    %cst_82 = arith.constant 0.000000e+00 : f32
    %98 = vector.broadcast %cst_82 : f32 to vector<1x128xf32>
    %c9_83 = arith.constant 9 : index
    %c0_84 = arith.constant 0 : index
    %99 = vector.load %arg21[%c9_83, %c0_84] : memref<10x128xf32, #tpu.memory_space<vmem>>, vector<1x128xf32>
    tpu.vector_store %arg21[%c9_83, %c0_84], %98 {strides = array<i32>} : memref<10x128xf32, #tpu.memory_space<vmem>>, vector<1x128xf32>,
    %c1_85 = arith.constant 1 : index
    %c0_86 = arith.constant 0 : index
    %100 = vector.load %arg21[%c1_85, %c0_86] : memref<10x128xf32, #tpu.memory_space<vmem>>, vector<8x128xf32>
    tpu.vector_store %arg21[%c1_85, %c0_86], %95 {strides = array<i32>} : memref<10x128xf32, #tpu.memory_space<vmem>>, vector<8x128xf32>,
    %c0_87 = arith.constant 0 : index
    %c0_88 = arith.constant 0 : index
    %101 = tpu.strided_load %arg21[%c0_87, %c0_88] {strides = array<i32: 2, 1>} : memref<10x128xf32, #tpu.memory_space<vmem>>, vector<4x128xf32>
    %102 = arith.truncf %101 : vector<4x128xf32> to vector<4x128xbf16>
    %c0_89 = arith.constant 0 : index
    %c0_90 = arith.constant 0 : index
    %c0_91 = arith.constant 0 : index
    %103 = vector.load %arg11[%c0_89, %c0_90, %c0_91] : memref<3x128x128xbf16, #tpu.memory_space<vmem>>, vector<1x128x128xbf16>
    %104 = vector.shape_cast %103 : vector<1x128x128xbf16> to vector<128x128xbf16>
    %cst_92 = arith.constant dense<0.000000e+00> : vector<4x128xf32>
    %105 = tpu.matmul %102, %104, %cst_92 {dimension_numbers = #tpu.dot_dimension_numbers<[1], [0], [0], [1], [0, 0, 1, 1], [], []>} : vector<4x128xbf16>, vector<128x128xbf16>, vector<4x128xf32> -> vector<4x128xf32>
    %c1_93 = arith.constant 1 : index
    %c0_94 = arith.constant 0 : index
    %106 = tpu.strided_load %arg21[%c1_93, %c0_94] {strides = array<i32: 2, 1>} : memref<10x128xf32, #tpu.memory_space<vmem>>, vector<4x128xf32>
    %107 = arith.truncf %106 : vector<4x128xf32> to vector<4x128xbf16>
    %c1_95 = arith.constant 1 : index
    %c0_96 = arith.constant 0 : index
    %c0_97 = arith.constant 0 : index
    %108 = vector.load %arg11[%c1_95, %c0_96, %c0_97] : memref<3x128x128xbf16, #tpu.memory_space<vmem>>, vector<1x128x128xbf16>
    %109 = vector.shape_cast %108 : vector<1x128x128xbf16> to vector<128x128xbf16>
    %cst_98 = arith.constant dense<0.000000e+00> : vector<4x128xf32>
    %110 = tpu.matmul %107, %109, %cst_98 {dimension_numbers = #tpu.dot_dimension_numbers<[1], [0], [0], [1], [0, 0, 1, 1], [], []>} : vector<4x128xbf16>, vector<128x128xbf16>, vector<4x128xf32> -> vector<4x128xf32>
    %111 = arith.addf %105, %110 : vector<4x128xf32>
    %c2_99 = arith.constant 2 : index
    %c0_100 = arith.constant 0 : index
    %112 = tpu.strided_load %arg21[%c2_99, %c0_100] {strides = array<i32: 2, 1>} : memref<10x128xf32, #tpu.memory_space<vmem>>, vector<4x128xf32>
    %113 = arith.truncf %112 : vector<4x128xf32> to vector<4x128xbf16>
    %c2_101 = arith.constant 2 : index
    %c0_102 = arith.constant 0 : index
    %c0_103 = arith.constant 0 : index
    %114 = vector.load %arg11[%c2_101, %c0_102, %c0_103] : memref<3x128x128xbf16, #tpu.memory_space<vmem>>, vector<1x128x128xbf16>
    %115 = vector.shape_cast %114 : vector<1x128x128xbf16> to vector<128x128xbf16>
    %cst_104 = arith.constant dense<0.000000e+00> : vector<4x128xf32>
    %116 = tpu.matmul %113, %115, %cst_104 {dimension_numbers = #tpu.dot_dimension_numbers<[1], [0], [0], [1], [0, 0, 1, 1], [], []>} : vector<4x128xbf16>, vector<128x128xbf16>, vector<4x128xf32> -> vector<4x128xf32>
    %117 = arith.addf %111, %116 : vector<4x128xf32>
    %c0_105 = arith.constant 0 : index
    %c0_106 = arith.constant 0 : index
    %118 = vector.load %arg12[%c0_105, %c0_106] : memref<1x128xf32, #tpu.memory_space<vmem>>, vector<1x128xf32>
    %119 = vector.broadcast %118 : vector<1x128xf32> to vector<4x128xf32>
    %120 = arith.mulf %117, %119 : vector<4x128xf32>
    %c0_107 = arith.constant 0 : index
    %c0_108 = arith.constant 0 : index
    %121 = vector.load %arg13[%c0_107, %c0_108] : memref<1x128xf32, #tpu.memory_space<vmem>>, vector<1x128xf32>
    %122 = vector.broadcast %121 : vector<1x128xf32> to vector<4x128xf32>
    %123 = arith.addf %120, %122 : vector<4x128xf32>
    %cst_109 = arith.constant 0.000000e+00 : f32
    %124 = vector.broadcast %cst_109 : f32 to vector<4x128xf32>
    %125 = arith.cmpf oge, %123, %124 : vector<4x128xf32>
    %cst_110 = arith.constant 2.000000e-01 : f32
    %126 = vector.broadcast %cst_110 : f32 to vector<4x128xf32>
    %127 = arith.mulf %126, %123 : vector<4x128xf32>
    %128 = arith.select %125, %123, %127 : vector<4x128xi1>, vector<4x128xf32>
    %c0_111 = arith.constant 0 : index
    %c0_112 = arith.constant 0 : index
    %129 = vector.load %arg22[%c0_111, %c0_112] : memref<4x128xf32, #tpu.memory_space<vmem>>, vector<4x128xf32>
    tpu.vector_store %arg22[%c0_111, %c0_112], %128 {strides = array<i32>} : memref<4x128xf32, #tpu.memory_space<vmem>>, vector<4x128xf32>,
    %cst_113 = arith.constant 0.000000e+00 : f32
    %130 = vector.broadcast %cst_113 : f32 to vector<1x128xf32>
    %c0_114 = arith.constant 0 : index
    %c0_115 = arith.constant 0 : index
    %131 = vector.load %arg22[%c0_114, %c0_115] : memref<4x128xf32, #tpu.memory_space<vmem>>, vector<1x128xf32>
    %132 = arith.truncf %131 : vector<1x128xf32> to vector<1x128xbf16>
    %c0_116 = arith.constant 0 : index
    %c0_117 = arith.constant 0 : index
    %c0_118 = arith.constant 0 : index
    %133 = vector.load %arg14[%c0_116, %c0_117, %c0_118] : memref<4x128x128xbf16, #tpu.memory_space<vmem>>, vector<1x128x128xbf16>
    %134 = vector.shape_cast %133 : vector<1x128x128xbf16> to vector<128x128xbf16>
    %cst_119 = arith.constant dense<0.000000e+00> : vector<1x128xf32>
    %135 = tpu.matmul %132, %134, %cst_119 {dimension_numbers = #tpu.dot_dimension_numbers<[1], [0], [0], [1], [0, 0, 1, 1], [], []>} : vector<1x128xbf16>, vector<128x128xbf16>, vector<1x128xf32> -> vector<1x128xf32>
    %136 = arith.addf %130, %135 : vector<1x128xf32>
    %c1_120 = arith.constant 1 : index
    %c0_121 = arith.constant 0 : index
    %137 = vector.load %arg22[%c1_120, %c0_121] : memref<4x128xf32, #tpu.memory_space<vmem>>, vector<1x128xf32>
    %138 = arith.truncf %137 : vector<1x128xf32> to vector<1x128xbf16>
    %c1_122 = arith.constant 1 : index
    %c0_123 = arith.constant 0 : index
    %c0_124 = arith.constant 0 : index
    %139 = vector.load %arg14[%c1_122, %c0_123, %c0_124] : memref<4x128x128xbf16, #tpu.memory_space<vmem>>, vector<1x128x128xbf16>
    %140 = vector.shape_cast %139 : vector<1x128x128xbf16> to vector<128x128xbf16>
    %cst_125 = arith.constant dense<0.000000e+00> : vector<1x128xf32>
    %141 = tpu.matmul %138, %140, %cst_125 {dimension_numbers = #tpu.dot_dimension_numbers<[1], [0], [0], [1], [0, 0, 1, 1], [], []>} : vector<1x128xbf16>, vector<128x128xbf16>, vector<1x128xf32> -> vector<1x128xf32>
    %142 = arith.addf %136, %141 : vector<1x128xf32>
    %c2_126 = arith.constant 2 : index
    %c0_127 = arith.constant 0 : index
    %143 = vector.load %arg22[%c2_126, %c0_127] : memref<4x128xf32, #tpu.memory_space<vmem>>, vector<1x128xf32>
    %144 = arith.truncf %143 : vector<1x128xf32> to vector<1x128xbf16>
    %c2_128 = arith.constant 2 : index
    %c0_129 = arith.constant 0 : index
    %c0_130 = arith.constant 0 : index
    %145 = vector.load %arg14[%c2_128, %c0_129, %c0_130] : memref<4x128x128xbf16, #tpu.memory_space<vmem>>, vector<1x128x128xbf16>
    %146 = vector.shape_cast %145 : vector<1x128x128xbf16> to vector<128x128xbf16>
    %cst_131 = arith.constant dense<0.000000e+00> : vector<1x128xf32>
    %147 = tpu.matmul %144, %146, %cst_131 {dimension_numbers = #tpu.dot_dimension_numbers<[1], [0], [0], [1], [0, 0, 1, 1], [], []>} : vector<1x128xbf16>, vector<128x128xbf16>, vector<1x128xf32> -> vector<1x128xf32>
    %148 = arith.addf %142, %147 : vector<1x128xf32>
    %c3 = arith.constant 3 : index
    %c0_132 = arith.constant 0 : index
    %149 = vector.load %arg22[%c3, %c0_132] : memref<4x128xf32, #tpu.memory_space<vmem>>, vector<1x128xf32>
    %150 = arith.truncf %149 : vector<1x128xf32> to vector<1x128xbf16>
    %c3_133 = arith.constant 3 : index
    %c0_134 = arith.constant 0 : index
    %c0_135 = arith.constant 0 : index
    %151 = vector.load %arg14[%c3_133, %c0_134, %c0_135] : memref<4x128x128xbf16, #tpu.memory_space<vmem>>, vector<1x128x128xbf16>
    %152 = vector.shape_cast %151 : vector<1x128x128xbf16> to vector<128x128xbf16>
    %cst_136 = arith.constant dense<0.000000e+00> : vector<1x128xf32>
    %153 = tpu.matmul %150, %152, %cst_136 {dimension_numbers = #tpu.dot_dimension_numbers<[1], [0], [0], [1], [0, 0, 1, 1], [], []>} : vector<1x128xbf16>, vector<128x128xbf16>, vector<1x128xf32> -> vector<1x128xf32>
    %154 = arith.addf %148, %153 : vector<1x128xf32>
    %c0_137 = arith.constant 0 : index
    %c0_138 = arith.constant 0 : index
    %155 = vector.load %arg15[%c0_137, %c0_138] : memref<1x128xf32, #tpu.memory_space<vmem>>, vector<1x128xf32>
    %156 = arith.addf %154, %155 : vector<1x128xf32>
    %cst_139 = arith.constant 0.000000e+00 : f32
    %157 = vector.broadcast %cst_139 : f32 to vector<1x128xf32>
    %158 = arith.cmpf oge, %156, %157 : vector<1x128xf32>
    %cst_140 = arith.constant 2.000000e-01 : f32
    %159 = vector.broadcast %cst_140 : f32 to vector<1x128xf32>
    %160 = arith.mulf %159, %156 : vector<1x128xf32>
    %161 = arith.select %158, %156, %160 : vector<1x128xi1>, vector<1x128xf32>
    %c0_141 = arith.constant 0 : index
    %c0_142 = arith.constant 0 : index
    %162 = vector.load %arg16[%c0_141, %c0_142] : memref<1x128xf32, #tpu.memory_space<vmem>>, vector<1x128xf32>
    %163 = arith.mulf %161, %162 : vector<1x128xf32>
    %cst_143 = arith.constant dense<0.000000e+00> : vector<1xf32>
    %164 = vector.multi_reduction <add>, %163, %cst_143 [1] : vector<1x128xf32> to vector<1xf32>
    %165 = vector.shape_cast %164 : vector<1xf32> to vector<1x1xf32>
    %c0_144 = arith.constant 0 : index
    %c0_145 = arith.constant 0 : index
    %166 = vector.load %arg17[%c0_144, %c0_145] : memref<1x1xf32, #tpu.memory_space<vmem>>, vector<1x1xf32>
    %167 = arith.addf %165, %166 : vector<1x1xf32>
    %168 = vector.shape_cast %167 : vector<1x1xf32> to vector<1x1xf32>
    %169 = vector.broadcast %168 : vector<1x1xf32> to vector<1x128xf32>
    %c0_146 = arith.constant 0 : index
    %c0_147 = arith.constant 0 : index
    %c0_148 = arith.constant 0 : index
    %170 = vector.load %arg18[%c0_146, %c0_147, %c0_148] : memref<1x1x128xf32, #tpu.memory_space<vmem>>, vector<1x1x128xf32>
    %171 = vector.shape_cast %170 : vector<1x1x128xf32> to vector<1x128xf32>
    %172 = vector.shape_cast %169 : vector<1x128xf32> to vector<1x1x128xf32>
    tpu.vector_store %arg18[%c0_146, %c0_147, %c0_148], %172 {strides = array<i32>} : memref<1x1x128xf32, #tpu.memory_space<vmem>>, vector<1x1x128xf32>,
    return
  }
  func.func @transform_0(%arg0: i32) -> (i32, i32, i32) {
    %c0_i32 = arith.constant 0 : i32
    %c0_i32_0 = arith.constant 0 : i32
    %c0_i32_1 = arith.constant 0 : i32
    return %arg0, %c0_i32, %c0_i32_0 : i32, i32, i32
  }
  func.func @transform_1(%arg0: i32) -> (i32, i32, i32) {
    %c0_i32 = arith.constant 0 : i32
    %c0_i32_0 = arith.constant 0 : i32
    %c0_i32_1 = arith.constant 0 : i32
    %c0_i32_2 = arith.constant 0 : i32
    return %c0_i32, %c0_i32_0, %c0_i32_1 : i32, i32, i32
  }
  func.func @transform_2(%arg0: i32) -> (i32, i32) {
    %c0_i32 = arith.constant 0 : i32
    %c0_i32_0 = arith.constant 0 : i32
    %c0_i32_1 = arith.constant 0 : i32
    return %c0_i32, %c0_i32_0 : i32, i32
  }
  func.func @transform_3(%arg0: i32) -> (i32, i32) {
    %c0_i32 = arith.constant 0 : i32
    %c0_i32_0 = arith.constant 0 : i32
    %c0_i32_1 = arith.constant 0 : i32
    return %c0_i32, %c0_i32_0 : i32, i32
  }
  func.func @transform_4(%arg0: i32) -> (i32, i32, i32) {
    %c0_i32 = arith.constant 0 : i32
    %c0_i32_0 = arith.constant 0 : i32
    %c0_i32_1 = arith.constant 0 : i32
    %c0_i32_2 = arith.constant 0 : i32
    return %c0_i32, %c0_i32_0, %c0_i32_1 : i32, i32, i32
  }
  func.func @transform_5(%arg0: i32) -> (i32, i32) {
    %c0_i32 = arith.constant 0 : i32
    %c0_i32_0 = arith.constant 0 : i32
    %c0_i32_1 = arith.constant 0 : i32
    return %c0_i32, %c0_i32_0 : i32, i32
  }
  func.func @transform_6(%arg0: i32) -> (i32, i32) {
    %c0_i32 = arith.constant 0 : i32
    %c0_i32_0 = arith.constant 0 : i32
    %c0_i32_1 = arith.constant 0 : i32
    return %c0_i32, %c0_i32_0 : i32, i32
  }
  func.func @transform_7(%arg0: i32) -> (i32, i32, i32) {
    %c0_i32 = arith.constant 0 : i32
    %c0_i32_0 = arith.constant 0 : i32
    %c0_i32_1 = arith.constant 0 : i32
    %c0_i32_2 = arith.constant 0 : i32
    return %c0_i32, %c0_i32_0, %c0_i32_1 : i32, i32, i32
  }
  func.func @transform_8(%arg0: i32) -> (i32, i32) {
    %c0_i32 = arith.constant 0 : i32
    %c0_i32_0 = arith.constant 0 : i32
    %c0_i32_1 = arith.constant 0 : i32
    return %c0_i32, %c0_i32_0 : i32, i32
  }
  func.func @transform_9(%arg0: i32) -> (i32, i32) {
    %c0_i32 = arith.constant 0 : i32
    %c0_i32_0 = arith.constant 0 : i32
    %c0_i32_1 = arith.constant 0 : i32
    return %c0_i32, %c0_i32_0 : i32, i32
  }
  func.func @transform_10(%arg0: i32) -> (i32, i32, i32) {
    %c0_i32 = arith.constant 0 : i32
    %c0_i32_0 = arith.constant 0 : i32
    %c0_i32_1 = arith.constant 0 : i32
    %c0_i32_2 = arith.constant 0 : i32
    return %c0_i32, %c0_i32_0, %c0_i32_1 : i32, i32, i32
  }
  func.func @transform_11(%arg0: i32) -> (i32, i32) {
    %c0_i32 = arith.constant 0 : i32
    %c0_i32_0 = arith.constant 0 : i32
    %c0_i32_1 = arith.constant 0 : i32
    return %c0_i32, %c0_i32_0 : i32, i32
  }
  func.func @transform_12(%arg0: i32) -> (i32, i32) {
    %c0_i32 = arith.constant 0 : i32
    %c0_i32_0 = arith.constant 0 : i32
    %c0_i32_1 = arith.constant 0 : i32
    return %c0_i32, %c0_i32_0 : i32, i32
  }
  func.func @transform_13(%arg0: i32) -> (i32, i32, i32) {
    %c0_i32 = arith.constant 0 : i32
    %c0_i32_0 = arith.constant 0 : i32
    %c0_i32_1 = arith.constant 0 : i32
    %c0_i32_2 = arith.constant 0 : i32
    return %c0_i32, %c0_i32_0, %c0_i32_1 : i32, i32, i32
  }
  func.func @transform_14(%arg0: i32) -> (i32, i32) {
    %c0_i32 = arith.constant 0 : i32
    %c0_i32_0 = arith.constant 0 : i32
    %c0_i32_1 = arith.constant 0 : i32
    return %c0_i32, %c0_i32_0 : i32, i32
  }
  func.func @transform_15(%arg0: i32) -> (i32, i32) {
    %c0_i32 = arith.constant 0 : i32
    %c0_i32_0 = arith.constant 0 : i32
    %c0_i32_1 = arith.constant 0 : i32
    return %c0_i32, %c0_i32_0 : i32, i32
  }
  func.func @transform_16(%arg0: i32) -> (i32, i32) {
    %c0_i32 = arith.constant 0 : i32
    %c0_i32_0 = arith.constant 0 : i32
    %c0_i32_1 = arith.constant 0 : i32
    return %c0_i32, %c0_i32_0 : i32, i32
  }
  func.func @transform_17(%arg0: i32) -> (i32, i32, i32) {
    %c0_i32 = arith.constant 0 : i32
    %c0_i32_0 = arith.constant 0 : i32
    %c0_i32_1 = arith.constant 0 : i32
    return %arg0, %c0_i32, %c0_i32_0 : i32, i32, i32
  }
}

</mosaic_0001>

<llo_original>
// kernel: vgg_style_discriminator_1d.1
$region0: #{vgg_style_discriminator_1d.1}
  #allocation0 [shape = 'u32[]', space=smem, size = 0x4, offset = 0x4, fixed_abs, tag = 'smem constant byte address 0x4 - core index']
  #allocation1 [shape = 'u32[144,128]{1,0:T(1,128)}', space=vmem, size = 0x12000, scoped, tag = 'internal scratch']
  #allocation2 [shape = 'f32[18,128]{1,0:T(8,128)}', space=vmem, size = 0x3000, scoped, tag = 'scratch operand']
  #allocation3 [shape = 'f32[10,128]{1,0:T(8,128)}', space=vmem, size = 0x2000, scoped, tag = 'scratch operand']
  #allocation4 [shape = 'f32[10,128]{1,0:T(8,128)}', space=vmem, size = 0x2000, scoped, tag = 'scratch operand']
  #allocation5 [shape = 'f32[4,128]{1,0:T(4,128)}', space=vmem, size = 0x800, scoped, tag = 'scratch operand']
  #allocation6 [shape = 'f32[1,1]{1,0:T(1,128)S(1)}', space=vmem, size = 0x200, scoped, tag = 'scoped memory for vgg_style_discriminator_1d.1']
  %s0 = inlined_call_operand.vmem [shape: f32[2,18,128], index: 0, kind: input, shape index: {}]
  %s1 = inlined_call_operand.vmem [shape: bf16[3,128,128], index: 1, kind: input, shape index: {}]
  %s2 = inlined_call_operand.vmem [shape: f32[1,128], index: 2, kind: input, shape index: {}]
  %s3 = inlined_call_operand.vmem [shape: f32[1,128], index: 3, kind: input, shape index: {}]
  %s4 = inlined_call_operand.vmem [shape: bf16[3,128,128], index: 4, kind: input, shape index: {}]
  %s5 = inlined_call_operand.vmem [shape: f32[1,128], index: 5, kind: input, shape index: {}]
  %s6 = inlined_call_operand.vmem [shape: f32[1,128], index: 6, kind: input, shape index: {}]
  %s7 = inlined_call_operand.vmem [shape: bf16[3,128,128], index: 7, kind: input, shape index: {}]
  %s8 = inlined_call_operand.vmem [shape: f32[1,128], index: 8, kind: input, shape index: {}]
  %s9 = inlined_call_operand.vmem [shape: f32[1,128], index: 9, kind: input, shape index: {}]
  %s10 = inlined_call_operand.vmem [shape: bf16[3,128,128], index: 10, kind: input, shape index: {}]
  %s11 = inlined_call_operand.vmem [shape: f32[1,128], index: 11, kind: input, shape index: {}]
  %s12 = inlined_call_operand.vmem [shape: f32[1,128], index: 12, kind: input, shape index: {}]
  %s13 = inlined_call_operand.vmem [shape: bf16[4,128,128], index: 13, kind: input, shape index: {}]
  %s14 = inlined_call_operand.vmem [shape: f32[1,128], index: 14, kind: input, shape index: {}]
  %s15 = inlined_call_operand.vmem [shape: f32[1,128], index: 15, kind: input, shape index: {}]
  %s16 = inlined_call_operand.<no memory space> [shape: f32[1,1], index: 16, kind: input, shape index: {}]
  %s17 = inlined_call_operand.vmem [shape: f32[2,1,128], index: 17, kind: output, shape index: {}]
  %s18 = sld [smem:[#allocation0]]
  $region101: #{vgg_style_discriminator_1d.1} parent=0
    _
  %s20 = ssub.s32 1, %s18
  %s21 = scalar_select 0, %s20, %s18
  %v22 = vstv %s16
  %23 = vst [vmem:[#allocation6] sm:$0x1] %v22
  loop: start=0, step=1, limit=4
  $region2: #{vgg_style_discriminator_1d.1} parent=0 // loop_pre_header
    _
  $region3: #{vgg_style_discriminator_1d.1} parent=0 // loop_header
    %s25 = sphi 0, %s29
    %p26 = scmp.ge.s32.totalorder %s25, 4
    %s35 = sphi 0, %s37
    %s38 = sphi 0, %s35
    %s39 = sphi 0, %s38
    %s55 = sphi 0, %s39
    %s59 = sphi 0, %s59
    %s61 = sphi 0, %s59
    %s62 = sphi 0, %s61
    %s76 = sphi 0, %s62
    %s80 = sphi 0, %s80
    %s82 = sphi 0, %s80
    %s83 = sphi 0, %s82
    %s97 = sphi 0, %s83
    %s101 = sphi 0, %s101
    %s103 = sphi 0, %s101
    %s104 = sphi 0, %s103
    %s118 = sphi 0, %s104
    %s122 = sphi 0, %s122
    %s124 = sphi 0, %s122
    %s125 = sphi 0, %s124
    %s139 = sphi 0, %s125
    %s143 = sphi 0, %s143
    %s145 = sphi 0, %s143
    %s146 = sphi 0, %s145
    %s160 = sphi 0, %s146
    %s164 = sphi 0, %s164
    %s166 = sphi 0, %s164
    %s167 = sphi 0, %s166
    %s181 = sphi 0, %s167
    %s185 = sphi 0, %s185
    %s187 = sphi 0, %s185
    %s188 = sphi 0, %s187
    %s202 = sphi 0, %s188
    %s206 = sphi 0, %s206
    %s208 = sphi 0, %s206
    %s209 = sphi 0, %s208
    %s223 = sphi 0, %s209
    %s227 = sphi 0, %s227
    %s229 = sphi 0, %s227
    %s230 = sphi 0, %s229
    %s244 = sphi 0, %s230
    %s248 = sphi 0, %s248
    %s250 = sphi 0, %s248
    %s251 = sphi 0, %s250
    %s265 = sphi 0, %s251
    %s269 = sphi 0, %s269
    %s271 = sphi 0, %s269
    %s272 = sphi 0, %s271
    %s286 = sphi 0, %s272
    %s290 = sphi 0, %s290
    %s292 = sphi 0, %s290
    %s293 = sphi 0, %s292
    %s307 = sphi 0, %s293
    %s311 = sphi 0, %s311
    %s313 = sphi 0, %s311
    %s314 = sphi 0, %s313
    %s328 = sphi 0, %s314
    %s332 = sphi 0, %s332
    %s334 = sphi 0, %s332
    %s335 = sphi 0, %s334
    %s349 = sphi 0, %s335
    %s353 = sphi 0, %s353
    %s355 = sphi 0, %s353
    %s356 = sphi 0, %s355
    %s370 = sphi 0, %s356
    %s374 = sphi 0, %s374
    %s376 = sphi 0, %s374
    %s377 = sphi 0, %s376
    %s391 = sphi 0, %s377
    %s397 = sphi 0, %s399
    %s400 = sphi 0, %s397
    %s401 = sphi 0, %s400
    %s417 = sphi 0, %s401
  $region4: #{vgg_style_discriminator_1d.1} parent=0 // loop_header_branch
    %28 = sbr.rel (%p26) target = $region8
  $region5: #{vgg_style_discriminator_1d.1} parent=0 // loop_body
    %s30 = ssub.s32 %s25, 1
    %s31 = ssub.s32 %s25, 2
    %s32 = sadd.s32 %s25, 1
    %s33 = ssub.s32 %s25, %s32
    %p34 = scmp.eq.s32.totalorder %s33, 0
    %s36 = sadd.s32 %s35, 1
    %s37 = scalar_select %p34, %s35, %s36
    %p40 = pneg %p34
    %p41 = scmp.eq.s32.totalorder %s25, 1
    %p42 = por %p40, %p41
    %p43 = scmp.ne.s32.totalorder %s35, %s38
    %p44 = scmp.eq.s32.totalorder %s25, 0
    %p45 = por %p43, %p44
    %p46 = scmp.ne.s32.totalorder %s35, %s38
    %p47 = scmp.eq.s32.totalorder %s30, 1
    %p48 = por %p46, %p47
    %p49 = scmp.ne.s32.totalorder %s38, %s39
    %p50 = scmp.eq.s32.totalorder %s30, 0
    %p51 = por %p49, %p50
    %p52 = scmp.ne.s32.totalorder %s38, %s39
    %p53 = scmp.eq.s32.totalorder %s31, 1
    %p54 = por %p52, %p53
    %p56 = scmp.ne.s32.totalorder %s39, %s55
    %p57 = scmp.eq.s32.totalorder %s31, 0
    %p58 = por %p56, %p57
    %s60 = sadd.s32 %s59, 1
    %p63 = scmp.eq.s32.totalorder %s25, 1
    %p64 = scmp.ne.s32.totalorder %s59, %s61
    %p65 = scmp.eq.s32.totalorder %s25, 0
    %p66 = por %p64, %p65
    %p67 = scmp.ne.s32.totalorder %s59, %s61
    %p68 = scmp.eq.s32.totalorder %s30, 1
    %p69 = por %p67, %p68
    %p70 = scmp.ne.s32.totalorder %s61, %s62
    %p71 = scmp.eq.s32.totalorder %s30, 0
    %p72 = por %p70, %p71
    %p73 = scmp.ne.s32.totalorder %s61, %s62
    %p74 = scmp.eq.s32.totalorder %s31, 1
    %p75 = por %p73, %p74
    %p77 = scmp.ne.s32.totalorder %s62, %s76
    %p78 = scmp.eq.s32.totalorder %s31, 0
    %p79 = por %p77, %p78
    %s81 = sadd.s32 %s80, 1
    %p84 = scmp.eq.s32.totalorder %s25, 1
    %p85 = scmp.ne.s32.totalorder %s80, %s82
    %p86 = scmp.eq.s32.totalorder %s25, 0
    %p87 = por %p85, %p86
    %p88 = scmp.ne.s32.totalorder %s80, %s82
    %p89 = scmp.eq.s32.totalorder %s30, 1
    %p90 = por %p88, %p89
    %p91 = scmp.ne.s32.totalorder %s82, %s83
    %p92 = scmp.eq.s32.totalorder %s30, 0
    %p93 = por %p91, %p92
    %p94 = scmp.ne.s32.totalorder %s82, %s83
    %p95 = scmp.eq.s32.totalorder %s31, 1
    %p96 = por %p94, %p95
    %p98 = scmp.ne.s32.totalorder %s83, %s97
    %p99 = scmp.eq.s32.totalorder %s31, 0
    %p100 = por %p98, %p99
    %s102 = sadd.s32 %s101, 1
    %p105 = scmp.eq.s32.totalorder %s25, 1
    %p106 = scmp.ne.s32.totalorder %s101, %s103
    %p107 = scmp.eq.s32.totalorder %s25, 0
    %p108 = por %p106, %p107
    %p109 = scmp.ne.s32.totalorder %s101, %s103
    %p110 = scmp.eq.s32.totalorder %s30, 1
    %p111 = por %p109, %p110
    %p112 = scmp.ne.s32.totalorder %s103, %s104
    %p113 = scmp.eq.s32.totalorder %s30, 0
    %p114 = por %p112, %p113
    %p115 = scmp.ne.s32.totalorder %s103, %s104
    %p116 = scmp.eq.s32.totalorder %s31, 1
    %p117 = por %p115, %p116
    %p119 = scmp.ne.s32.totalorder %s104, %s118
    %p120 = scmp.eq.s32.totalorder %s31, 0
    %p121 = por %p119, %p120
    %s123 = sadd.s32 %s122, 1
    %p126 = scmp.eq.s32.totalorder %s25, 1
    %p127 = scmp.ne.s32.totalorder %s122, %s124
    %p128 = scmp.eq.s32.totalorder %s25, 0
    %p129 = por %p127, %p128
    %p130 = scmp.ne.s32.totalorder %s122, %s124
    %p131 = scmp.eq.s32.totalorder %s30, 1
    %p132 = por %p130, %p131
    %p133 = scmp.ne.s32.totalorder %s124, %s125
    %p134 = scmp.eq.s32.totalorder %s30, 0
    %p135 = por %p133, %p134
    %p136 = scmp.ne.s32.totalorder %s124, %s125
    %p137 = scmp.eq.s32.totalorder %s31, 1
    %p138 = por %p136, %p137
    %p140 = scmp.ne.s32.totalorder %s125, %s139
    %p141 = scmp.eq.s32.totalorder %s31, 0
    %p142 = por %p140, %p141
    %s144 = sadd.s32 %s143, 1
    %p147 = scmp.eq.s32.totalorder %s25, 1
    %p148 = scmp.ne.s32.totalorder %s143, %s145
    %p149 = scmp.eq.s32.totalorder %s25, 0
    %p150 = por %p148, %p149
    %p151 = scmp.ne.s32.totalorder %s143, %s145
    %p152 = scmp.eq.s32.totalorder %s30, 1
    %p153 = por %p151, %p152
    %p154 = scmp.ne.s32.totalorder %s145, %s146
    %p155 = scmp.eq.s32.totalorder %s30, 0
    %p156 = por %p154, %p155
    %p157 = scmp.ne.s32.totalorder %s145, %s146
    %p158 = scmp.eq.s32.totalorder %s31, 1
    %p159 = por %p157, %p158
    %p161 = scmp.ne.s32.totalorder %s146, %s160
    %p162 = scmp.eq.s32.totalorder %s31, 0
    %p163 = por %p161, %p162
    %s165 = sadd.s32 %s164, 1
    %p168 = scmp.eq.s32.totalorder %s25, 1
    %p169 = scmp.ne.s32.totalorder %s164, %s166
    %p170 = scmp.eq.s32.totalorder %s25, 0
    %p171 = por %p169, %p170
    %p172 = scmp.ne.s32.totalorder %s164, %s166
    %p173 = scmp.eq.s32.totalorder %s30, 1
    %p174 = por %p172, %p173
    %p175 = scmp.ne.s32.totalorder %s166, %s167
    %p176 = scmp.eq.s32.totalorder %s30, 0
    %p177 = por %p175, %p176
    %p178 = scmp.ne.s32.totalorder %s166, %s167
    %p179 = scmp.eq.s32.totalorder %s31, 1
    %p180 = por %p178, %p179
    %p182 = scmp.ne.s32.totalorder %s167, %s181
    %p183 = scmp.eq.s32.totalorder %s31, 0
    %p184 = por %p182, %p183
    %s186 = sadd.s32 %s185, 1
    %p189 = scmp.eq.s32.totalorder %s25, 1
    %p190 = scmp.ne.s32.totalorder %s185, %s187
    %p191 = scmp.eq.s32.totalorder %s25, 0
    %p192 = por %p190, %p191
    %p193 = scmp.ne.s32.totalorder %s185, %s187
    %p194 = scmp.eq.s32.totalorder %s30, 1
    %p195 = por %p193, %p194
    %p196 = scmp.ne.s32.totalorder %s187, %s188
    %p197 = scmp.eq.s32.totalorder %s30, 0
    %p198 = por %p196, %p197
    %p199 = scmp.ne.s32.totalorder %s187, %s188
    %p200 = scmp.eq.s32.totalorder %s31, 1
    %p201 = por %p199, %p200
    %p203 = scmp.ne.s32.totalorder %s188, %s202
    %p204 = scmp.eq.s32.totalorder %s31, 0
    %p205 = por %p203, %p204
    %s207 = sadd.s32 %s206, 1
    %p210 = scmp.eq.s32.totalorder %s25, 1
    %p211 = scmp.ne.s32.totalorder %s206, %s208
    %p212 = scmp.eq.s32.totalorder %s25, 0
    %p213 = por %p211, %p212
    %p214 = scmp.ne.s32.totalorder %s206, %s208
    %p215 = scmp.eq.s32.totalorder %s30, 1
    %p216 = por %p214, %p215
    %p217 = scmp.ne.s32.totalorder %s208, %s209
    %p218 = scmp.eq.s32.totalorder %s30, 0
    %p219 = por %p217, %p218
    %p220 = scmp.ne.s32.totalorder %s208, %s209
    %p221 = scmp.eq.s32.totalorder %s31, 1
    %p222 = por %p220, %p221
    %p224 = scmp.ne.s32.totalorder %s209, %s223
    %p225 = scmp.eq.s32.totalorder %s31, 0
    %p226 = por %p224, %p225
    %s228 = sadd.s32 %s227, 1
    %p231 = scmp.eq.s32.totalorder %s25, 1
    %p232 = scmp.ne.s32.totalorder %s227, %s229
    %p233 = scmp.eq.s32.totalorder %s25, 0
    %p234 = por %p232, %p233
    %p235 = scmp.ne.s32.totalorder %s227, %s229
    %p236 = scmp.eq.s32.totalorder %s30, 1
    %p237 = por %p235, %p236
    %p238 = scmp.ne.s32.totalorder %s229, %s230
    %p239 = scmp.eq.s32.totalorder %s30, 0
    %p240 = por %p238, %p239
    %p241 = scmp.ne.s32.totalorder %s229, %s230
    %p242 = scmp.eq.s32.totalorder %s31, 1
    %p243 = por %p241, %p242
    %p245 = scmp.ne.s32.totalorder %s230, %s244
    %p246 = scmp.eq.s32.totalorder %s31, 0
    %p247 = por %p245, %p246
    %s249 = sadd.s32 %s248, 1
    %p252 = scmp.eq.s32.totalorder %s25, 1
    %p253 = scmp.ne.s32.totalorder %s248, %s250
    %p254 = scmp.eq.s32.totalorder %s25, 0
    %p255 = por %p253, %p254
    %p256 = scmp.ne.s32.totalorder %s248, %s250
    %p257 = scmp.eq.s32.totalorder %s30, 1
    %p258 = por %p256, %p257
    %p259 = scmp.ne.s32.totalorder %s250, %s251
    %p260 = scmp.eq.s32.totalorder %s30, 0
    %p261 = por %p259, %p260
    %p262 = scmp.ne.s32.totalorder %s250, %s251
    %p263 = scmp.eq.s32.totalorder %s31, 1
    %p264 = por %p262, %p263
    %p266 = scmp.ne.s32.totalorder %s251, %s265
    %p267 = scmp.eq.s32.totalorder %s31, 0
    %p268 = por %p266, %p267
    %s270 = sadd.s32 %s269, 1
    %p273 = scmp.eq.s32.totalorder %s25, 1
    %p274 = scmp.ne.s32.totalorder %s269, %s271
    %p275 = scmp.eq.s32.totalorder %s25, 0
    %p276 = por %p274, %p275
    %p277 = scmp.ne.s32.totalorder %s269, %s271
    %p278 = scmp.eq.s32.totalorder %s30, 1
    %p279 = por %p277, %p278
    %p280 = scmp.ne.s32.totalorder %s271, %s272
    %p281 = scmp.eq.s32.totalorder %s30, 0
    %p282 = por %p280, %p281
    %p283 = scmp.ne.s32.totalorder %s271, %s272
    %p284 = scmp.eq.s32.totalorder %s31, 1
    %p285 = por %p283, %p284
    %p287 = scmp.ne.s32.totalorder %s272, %s286
    %p288 = scmp.eq.s32.totalorder %s31, 0
    %p289 = por %p287, %p288
    %s291 = sadd.s32 %s290, 1
    %p294 = scmp.eq.s32.totalorder %s25, 1
    %p295 = scmp.ne.s32.totalorder %s290, %s292
    %p296 = scmp.eq.s32.totalorder %s25, 0
    %p297 = por %p295, %p296
    %p298 = scmp.ne.s32.totalorder %s290, %s292
    %p299 = scmp.eq.s32.totalorder %s30, 1
    %p300 = por %p298, %p299
    %p301 = scmp.ne.s32.totalorder %s292, %s293
    %p302 = scmp.eq.s32.totalorder %s30, 0
    %p303 = por %p301, %p302
    %p304 = scmp.ne.s32.totalorder %s292, %s293
    %p305 = scmp.eq.s32.totalorder %s31, 1
    %p306 = por %p304, %p305
    %p308 = scmp.ne.s32.totalorder %s293, %s307
    %p309 = scmp.eq.s32.totalorder %s31, 0
    %p310 = por %p308, %p309
    %s312 = sadd.s32 %s311, 1
    %p315 = scmp.eq.s32.totalorder %s25, 1
    %p316 = scmp.ne.s32.totalorder %s311, %s313
    %p317 = scmp.eq.s32.totalorder %s25, 0
    %p318 = por %p316, %p317
    %p319 = scmp.ne.s32.totalorder %s311, %s313
    %p320 = scmp.eq.s32.totalorder %s30, 1
    %p321 = por %p319, %p320
    %p322 = scmp.ne.s32.totalorder %s313, %s314
    %p323 = scmp.eq.s32.totalorder %s30, 0
    %p324 = por %p322, %p323
    %p325 = scmp.ne.s32.totalorder %s313, %s314
    %p326 = scmp.eq.s32.totalorder %s31, 1
    %p327 = por %p325, %p326
    %p329 = scmp.ne.s32.totalorder %s314, %s328
    %p330 = scmp.eq.s32.totalorder %s31, 0
    %p331 = por %p329, %p330
    %s333 = sadd.s32 %s332, 1
    %p336 = scmp.eq.s32.totalorder %s25, 1
    %p337 = scmp.ne.s32.totalorder %s332, %s334
    %p338 = scmp.eq.s32.totalorder %s25, 0
    %p339 = por %p337, %p338
    %p340 = scmp.ne.s32.totalorder %s332, %s334
    %p341 = scmp.eq.s32.totalorder %s30, 1
    %p342 = por %p340, %p341
    %p343 = scmp.ne.s32.totalorder %s334, %s335
    %p344 = scmp.eq.s32.totalorder %s30, 0
    %p345 = por %p343, %p344
    %p346 = scmp.ne.s32.totalorder %s334, %s335
    %p347 = scmp.eq.s32.totalorder %s31, 1
    %p348 = por %p346, %p347
    %p350 = scmp.ne.s32.totalorder %s335, %s349
    %p351 = scmp.eq.s32.totalorder %s31, 0
    %p352 = por %p350, %p351
    %s354 = sadd.s32 %s353, 1
    %p357 = scmp.eq.s32.totalorder %s25, 1
    %p358 = scmp.ne.s32.totalorder %s353, %s355
    %p359 = scmp.eq.s32.totalorder %s25, 0
    %p360 = por %p358, %p359
    %p361 = scmp.ne.s32.totalorder %s353, %s355
    %p362 = scmp.eq.s32.totalorder %s30, 1
    %p363 = por %p361, %p362
    %p364 = scmp.ne.s32.totalorder %s355, %s356
    %p365 = scmp.eq.s32.totalorder %s30, 0
    %p366 = por %p364, %p365
    %p367 = scmp.ne.s32.totalorder %s355, %s356
    %p368 = scmp.eq.s32.totalorder %s31, 1
    %p369 = por %p367, %p368
    %p371 = scmp.ne.s32.totalorder %s356, %s370
    %p372 = scmp.eq.s32.totalorder %s31, 0
    %p373 = por %p371, %p372
    %s375 = sadd.s32 %s374, 1
    %p378 = scmp.eq.s32.totalorder %s25, 1
    %p379 = scmp.ne.s32.totalorder %s374, %s376
    %p380 = scmp.eq.s32.totalorder %s25, 0
    %p381 = por %p379, %p380
    %p382 = scmp.ne.s32.totalorder %s374, %s376
    %p383 = scmp.eq.s32.totalorder %s30, 1
    %p384 = por %p382, %p383
    %p385 = scmp.ne.s32.totalorder %s376, %s377
    %p386 = scmp.eq.s32.totalorder %s30, 0
    %p387 = por %p385, %p386
    %p388 = scmp.ne.s32.totalorder %s376, %s377
    %p389 = scmp.eq.s32.totalorder %s31, 1
    %p390 = por %p388, %p389
    %p392 = scmp.ne.s32.totalorder %s377, %s391
    %p393 = scmp.eq.s32.totalorder %s31, 0
    %p394 = por %p392, %p393
    %s395 = ssub.s32 %s25, %s32
    %p396 = scmp.eq.s32.totalorder %s395, 0
    %s398 = sadd.s32 %s397, 1
    %s399 = scalar_select %p396, %s397, %s398
    %p402 = pneg %p396
    %p403 = scmp.eq.s32.totalorder %s25, 1
    %p404 = por %p402, %p403
    %p405 = scmp.ne.s32.totalorder %s397, %s400
    %p406 = scmp.eq.s32.totalorder %s25, 0
    %p407 = por %p405, %p406
    %p408 = scmp.ne.s32.totalorder %s397, %s400
    %p409 = scmp.eq.s32.totalorder %s30, 1
    %p410 = por %p408, %p409
    %p411 = scmp.ne.s32.totalorder %s400, %s401
    %p412 = scmp.eq.s32.totalorder %s30, 0
    %p413 = por %p411, %p412
    %p414 = scmp.ne.s32.totalorder %s400, %s401
    %p415 = scmp.eq.s32.totalorder %s31, 1
    %p416 = por %p414, %p415
    %p418 = scmp.ne.s32.totalorder %s401, %s417
    %p419 = scmp.eq.s32.totalorder %s31, 0
    %p420 = por %p418, %p419
    %p421 = scmp.le.s32.totalorder 1, %s25
    %p422 = scmp.lt.s32.totalorder %s25, 3
    %p423 = pnand %p421, %p422
    %p424 = pneg %p423
    // Predicated region
    $region9: #{vgg_style_discriminator_1d.1} parent=5 // pred_check
      _
    $region10: #{vgg_style_discriminator_1d.1} parent=5 // pred_check_branch
      %426 = sbr.rel (%p423) target = $region12
    $region11: #{vgg_style_discriminator_1d.1} parent=5 // pred_region
      %s427 = ssub.s32 %s25, 1
      // Predicated region
      $region13: #{vgg_style_discriminator_1d.1} parent=11 // pred_check
        %p428 = pneg %p72
      $region14: #{vgg_style_discriminator_1d.1} parent=11 // pred_check_branch
        %430 = sbr.rel (%p428) target = $region16
      $region15: #{vgg_style_discriminator_1d.1} parent=11 // pred_region
        _
      $region16: #{vgg_style_discriminator_1d.1} parent=11 // pred_fallthru
        _
      // Predicated region
      $region17: #{vgg_style_discriminator_1d.1} parent=11 // pred_check
        %p431 = pneg %p93
      $region18: #{vgg_style_discriminator_1d.1} parent=11 // pred_check_branch
        %433 = sbr.rel (%p431) target = $region20
      $region19: #{vgg_style_discriminator_1d.1} parent=11 // pred_region
        _
      $region20: #{vgg_style_discriminator_1d.1} parent=11 // pred_fallthru
        _
      // Predicated region
      $region21: #{vgg_style_discriminator_1d.1} parent=11 // pred_check
        %p434 = pneg %p114
      $region22: #{vgg_style_discriminator_1d.1} parent=11 // pred_check_branch
        %436 = sbr.rel (%p434) target = $region24
      $region23: #{vgg_style_discriminator_1d.1} parent=11 // pred_region
        _
      $region24: #{vgg_style_discriminator_1d.1} parent=11 // pred_fallthru
        _
      // Predicated region
      $region25: #{vgg_style_discriminator_1d.1} parent=11 // pred_check
        %p437 = pneg %p135
      $region26: #{vgg_style_discriminator_1d.1} parent=11 // pred_check_branch
        %439 = sbr.rel (%p437) target = $region28
      $region27: #{vgg_style_discriminator_1d.1} parent=11 // pred_region
        _
      $region28: #{vgg_style_discriminator_1d.1} parent=11 // pred_fallthru
        _
      // Predicated region
      $region29: #{vgg_style_discriminator_1d.1} parent=11 // pred_check
        %p440 = pneg %p156
      $region30: #{vgg_style_discriminator_1d.1} parent=11 // pred_check_branch
        %442 = sbr.rel (%p440) target = $region32
      $region31: #{vgg_style_discriminator_1d.1} parent=11 // pred_region
        _
      $region32: #{vgg_style_discriminator_1d.1} parent=11 // pred_fallthru
        _
      // Predicated region
      $region33: #{vgg_style_discriminator_1d.1} parent=11 // pred_check
        %p443 = pneg %p177
      $region34: #{vgg_style_discriminator_1d.1} parent=11 // pred_check_branch
        %445 = sbr.rel (%p443) target = $region36
      $region35: #{vgg_style_discriminator_1d.1} parent=11 // pred_region
        _
      $region36: #{vgg_style_discriminator_1d.1} parent=11 // pred_fallthru
        _
      // Predicated region
      $region37: #{vgg_style_discriminator_1d.1} parent=11 // pred_check
        %p446 = pneg %p198
      $region38: #{vgg_style_discriminator_1d.1} parent=11 // pred_check_branch
        %448 = sbr.rel (%p446) target = $region40
      $region39: #{vgg_style_discriminator_1d.1} parent=11 // pred_region
        _
      $region40: #{vgg_style_discriminator_1d.1} parent=11 // pred_fallthru
        _
      // Predicated region
      $region41: #{vgg_style_discriminator_1d.1} parent=11 // pred_check
        %p449 = pneg %p219
      $region42: #{vgg_style_discriminator_1d.1} parent=11 // pred_check_branch
        %451 = sbr.rel (%p449) target = $region44
      $region43: #{vgg_style_discriminator_1d.1} parent=11 // pred_region
        _
      $region44: #{vgg_style_discriminator_1d.1} parent=11 // pred_fallthru
        _
      // Predicated region
      $region45: #{vgg_style_discriminator_1d.1} parent=11 // pred_check
        %p452 = pneg %p240
      $region46: #{vgg_style_discriminator_1d.1} parent=11 // pred_check_branch
        %454 = sbr.rel (%p452) target = $region48
      $region47: #{vgg_style_discriminator_1d.1} parent=11 // pred_region
        _
      $region48: #{vgg_style_discriminator_1d.1} parent=11 // pred_fallthru
        _
      // Predicated region
      $region49: #{vgg_style_discriminator_1d.1} parent=11 // pred_check
        %p455 = pneg %p261
      $region50: #{vgg_style_discriminator_1d.1} parent=11 // pred_check_branch
        %457 = sbr.rel (%p455) target = $region52
      $region51: #{vgg_style_discriminator_1d.1} parent=11 // pred_region
        _
      $region52: #{vgg_style_discriminator_1d.1} parent=11 // pred_fallthru
        _
      // Predicated region
      $region53: #{vgg_style_discriminator_1d.1} parent=11 // pred_check
        %p458 = pneg %p282
      $region54: #{vgg_style_discriminator_1d.1} parent=11 // pred_check_branch
        %460 = sbr.rel (%p458) target = $region56
      $region55: #{vgg_style_discriminator_1d.1} parent=11 // pred_region
        _
      $region56: #{vgg_style_discriminator_1d.1} parent=11 // pred_fallthru
        _
      // Predicated region
      $region57: #{vgg_style_discriminator_1d.1} parent=11 // pred_check
        %p461 = pneg %p303
      $region58: #{vgg_style_discriminator_1d.1} parent=11 // pred_check_branch
        %463 = sbr.rel (%p461) target = $region60
      $region59: #{vgg_style_discriminator_1d.1} parent=11 // pred_region
        _
      $region60: #{vgg_style_discriminator_1d.1} parent=11 // pred_fallthru
        _
      // Predicated region
      $region61: #{vgg_style_discriminator_1d.1} parent=11 // pred_check
        %p464 = pneg %p324
      $region62: #{vgg_style_discriminator_1d.1} parent=11 // pred_check_branch
        %466 = sbr.rel (%p464) target = $region64
      $region63: #{vgg_style_discriminator_1d.1} parent=11 // pred_region
        _
      $region64: #{vgg_style_discriminator_1d.1} parent=11 // pred_fallthru
        _
      // Predicated region
      $region65: #{vgg_style_discriminator_1d.1} parent=11 // pred_check
        %p467 = pneg %p345
      $region66: #{vgg_style_discriminator_1d.1} parent=11 // pred_check_branch
        %469 = sbr.rel (%p467) target = $region68
      $region67: #{vgg_style_discriminator_1d.1} parent=11 // pred_region
        _
      $region68: #{vgg_style_discriminator_1d.1} parent=11 // pred_fallthru
        _
      // Predicated region
      $region69: #{vgg_style_discriminator_1d.1} parent=11 // pred_check
        %p470 = pneg %p366
      $region70: #{vgg_style_discriminator_1d.1} parent=11 // pred_check_branch
        %472 = sbr.rel (%p470) target = $region72
      $region71: #{vgg_style_discriminator_1d.1} parent=11 // pred_region
        _
      $region72: #{vgg_style_discriminator_1d.1} parent=11 // pred_fallthru
        _
      // Predicated region
      $region73: #{vgg_style_discriminator_1d.1} parent=11 // pred_check
        %p473 = pneg %p387
      $region74: #{vgg_style_discriminator_1d.1} parent=11 // pred_check_branch
        %475 = sbr.rel (%p473) target = $region76
      $region75: #{vgg_style_discriminator_1d.1} parent=11 // pred_region
        _
      $region76: #{vgg_style_discriminator_1d.1} parent=11 // pred_fallthru
        _
    $region12: #{vgg_style_discriminator_1d.1} parent=5 // pred_fallthru
      _
    %p476 = scmp.lt.s32.totalorder %s25, 2
    // Predicated region
    $region77: #{vgg_style_discriminator_1d.1} parent=5 // pred_check
      %p477 = pneg %p476
    $region78: #{vgg_style_discriminator_1d.1} parent=5 // pred_check_branch
      %479 = sbr.rel (%p477) target = $region80
    $region79: #{vgg_style_discriminator_1d.1} parent=5 // pred_region
      // Predicated region
      $region81: #{vgg_style_discriminator_1d.1} parent=79 // pred_check
        %p480 = pneg %p45
      $region82: #{vgg_style_discriminator_1d.1} parent=79 // pred_check_branch
        %482 = sbr.rel (%p480) target = $region84
      $region83: #{vgg_style_discriminator_1d.1} parent=79 // pred_region
        %p483 = scmp.lt.s32.totalorder %s25, 1
        %s484 = scalar_select %p483, %s25, 1
        %s485 = smul.addr %s484, 3
        %s486 = smul.addr %s485, 8
        %s487 = scalar_lea.vmem %s0, %s486
      $region84: #{vgg_style_discriminator_1d.1} parent=79 // pred_fallthru
        _
    $region80: #{vgg_style_discriminator_1d.1} parent=5 // pred_fallthru
      _
    %p488 = scmp.le.s32.totalorder 1, %s25
    %p489 = scmp.lt.s32.totalorder %s25, 3
    %p490 = pnand %p488, %p489
    %p491 = pneg %p490
    // Predicated region
    $region85: #{vgg_style_discriminator_1d.1} parent=5 // pred_check
      _
    $region86: #{vgg_style_discriminator_1d.1} parent=5 // pred_check_branch
      %493 = sbr.rel (%p490) target = $region88
    $region87: #{vgg_style_discriminator_1d.1} parent=5 // pred_region
      %s494 = ssub.s32 %s25, 1
      %p495 = scmp.lt.s32.totalorder %s30, 1
      %s496 = scalar_select %p495, %s30, 1
      %s497 = smul.addr %s496, 3
      %s498 = smul.addr %s497, 8
      %s499 = scalar_lea.vmem %s0, %s498
      %p500 = pneg %p51
      %p501 = pneg %p48
      %p502 = pneg %p72
      %p503 = pneg %p69
      %p504 = pneg %p93
      %p505 = pneg %p90
      %p506 = pneg %p114
      %p507 = pneg %p111
      %p508 = pneg %p135
      %p509 = pneg %p132
      %p510 = pneg %p156
      %p511 = pneg %p153
      %p512 = pneg %p177
      %p513 = pneg %p174
      %p514 = pneg %p198
      %p515 = pneg %p195
      %p516 = pneg %p219
      %p517 = pneg %p216
      %p518 = pneg %p240
      %p519 = pneg %p237
      %p520 = pneg %p261
      %p521 = pneg %p258
      %p522 = pneg %p282
      %p523 = pneg %p279
      %p524 = pneg %p303
      %p525 = pneg %p300
      %p526 = pneg %p324
      %p527 = pneg %p321
      %p528 = pneg %p345
      %p529 = pneg %p342
      %p530 = pneg %p366
      %p531 = pneg %p363
      %p532 = pneg %p387
      %p533 = pneg %p384
      %p534 = pneg %p413
      %p535 = pneg %p410
      %p536 = scmp.lt.s32.totalorder %s30, 1
      %s537 = scalar_select %p536, %s30, 1
      %s538 = scalar_lea.vmem %s17, %s537
      %p539 = scmp.lt.s32.totalorder %s30, 1
      %s540 = scalar_select %p539, %s30, 1
      %s541 = smul.addr %s540, 3
      %s542 = smul.addr %s541, 8
      %s543 = scalar_lea.vmem %s0, %s542
      %p544 = scmp.lt.s32.totalorder %s30, 1
      %s545 = scalar_select %p544, %s30, 1
      %s546 = scalar_lea.vmem %s17, %s545
      %v548 = vld [vmem:[%s543] sm:$0xff]
      %v549 = vld [vmem:[%s543 + $0x8] sm:$0xff]
      %v550 = vld [vmem:[%s543 + $0x10] sm:$0x3]
      %v551 = vpack.c.bf16 %v549, %v548
      %v552 = vld [vmem:[%s1] sm:$0xf]
      %v553 = vld [vmem:[%s1 + $0x4] sm:$0xf]
      %v554 = vld [vmem:[%s1 + $0x8] sm:$0xf]
      %v555 = vld [vmem:[%s1 + $0xc] sm:$0xf]
      %v556 = vld [vmem:[%s1 + $0x10] sm:$0xf]
      %v557 = vld [vmem:[%s1 + $0x14] sm:$0xf]
      %v558 = vld [vmem:[%s1 + $0x18] sm:$0xf]
      %v559 = vld [vmem:[%s1 + $0x1c] sm:$0xf]
      %v560 = vld [vmem:[%s1 + $0x20] sm:$0xf]
      %v561 = vld [vmem:[%s1 + $0x24] sm:$0xf]
      %v562 = vld [vmem:[%s1 + $0x28] sm:$0xf]
      %v563 = vld [vmem:[%s1 + $0x2c] sm:$0xf]
      %v564 = vld [vmem:[%s1 + $0x30] sm:$0xf]
      %v565 = vld [vmem:[%s1 + $0x34] sm:$0xf]
      %v566 = vld [vmem:[%s1 + $0x38] sm:$0xf]
      %v567 = vld [vmem:[%s1 + $0x3c] sm:$0xf]
      %v568 = vpack.c.bf16 %v550, %v550
      %s569 = scalar_lea.vmem %s1, 64
      %v570 = vld [vmem:[%s569] sm:$0xf]
      %v571 = vld [vmem:[%s569 + $0x4] sm:$0xf]
      %v572 = vld [vmem:[%s569 + $0x8] sm:$0xf]
      %v573 = vld [vmem:[%s569 + $0xc] sm:$0xf]
      %v574 = vld [vmem:[%s569 + $0x10] sm:$0xf]
      %v575 = vld [vmem:[%s569 + $0x14] sm:$0xf]
      %v576 = vld [vmem:[%s569 + $0x18] sm:$0xf]
      %v577 = vld [vmem:[%s569 + $0x1c] sm:$0xf]
      %v578 = vld [vmem:[%s569 + $0x20] sm:$0xf]
      %v579 = vld [vmem:[%s569 + $0x24] sm:$0xf]
      %v580 = vld [vmem:[%s569 + $0x28] sm:$0xf]
      %v581 = vld [vmem:[%s569 + $0x2c] sm:$0xf]
      %v582 = vld [vmem:[%s569 + $0x30] sm:$0xf]
      %v583 = vld [vmem:[%s569 + $0x34] sm:$0xf]
      %v584 = vld [vmem:[%s569 + $0x38] sm:$0xf]
      %v585 = vld [vmem:[%s569 + $0x3c] sm:$0xf]
      %vm586 = vsmask.f32 7424
      %v588 = vshrl.u32 %v551, 16
      %v590 = vshll.u32 %v551, 16
      %v592 = vrot.slane %v590, 1
      %v593 = vor.u32 %v588, %v592
      %v595 = vshll.u32 %v568, 16
      %v597 = vrot.slane %v595, 1
      %v598 = vsel %vm586, %v593, %v597
      %v616 = vunpack.c.l.b16 %v570
      %v617 = vunpack.c.l.b16 %v571
      %v618 = vunpack.c.l.b16 %v572
      %v619 = vunpack.c.l.b16 %v573
      %v620 = vunpack.c.l.b16 %v574
      %v621 = vunpack.c.l.b16 %v575
      %v622 = vunpack.c.l.b16 %v576
      %v623 = vunpack.c.l.b16 %v577
      %v624 = vunpack.c.l.b16 %v578
      %v625 = vunpack.c.l.b16 %v579
      %v626 = vunpack.c.l.b16 %v580
      %v627 = vunpack.c.l.b16 %v581
      %v628 = vunpack.c.l.b16 %v582
      %v629 = vunpack.c.l.b16 %v583
      %v630 = vunpack.c.l.b16 %v584
      %v631 = vunpack.c.l.b16 %v585
      %v632 = vpack.c.b16 %v617, %v616
      %v633 = vpack.c.b16 %v619, %v618
      %v634 = vpack.c.b16 %v621, %v620
      %v635 = vpack.c.b16 %v623, %v622
      %v636 = vpack.c.b16 %v625, %v624
      %v637 = vpack.c.b16 %v627, %v626
      %v638 = vpack.c.b16 %v629, %v628
      %v639 = vpack.c.b16 %v631, %v630
      %648 = vmatprep.subr.bf16.mxu0 0
      %649 = vmatpush1.bf16.msra.mxu0 %v632
      %650 = vmatprep.subr.bf16.mxu0 0
      %651 = vmatpush1.bf16.msra.mxu0 %v633
      %652 = vmatprep.subr.bf16.mxu0 0
      %653 = vmatpush1.bf16.msra.mxu0 %v634
      %654 = vmatprep.subr.bf16.mxu0 0
      %655 = vmatpush1.bf16.msra.mxu0 %v635
      %656 = vmatprep.subr.bf16.mxu0 0
      %657 = vmatpush1.bf16.msra.mxu0 %v636
      %658 = vmatprep.subr.bf16.mxu0 0
      %659 = vmatpush1.bf16.msra.mxu0 %v637
      %660 = vmatprep.subr.bf16.mxu0 0
      %661 = vmatpush1.bf16.msra.mxu0 %v638
      %662 = vmatprep.subr.bf16.mxu0 0
      %663 = vmatpush1.bf16.msra.mxu0 %v639
      %664 = vmatprep.subr.bf16.mxu0 0
      %665 = vmatpush1.bf16.msra.mxu0 0
      %666 = vmatprep.subr.bf16.mxu0 0
      %667 = vmatpush1.bf16.msra.mxu0 0
      %668 = vmatprep.subr.bf16.mxu0 0
      %669 = vmatpush1.bf16.msra.mxu0 0
      %670 = vmatprep.subr.bf16.mxu0 0
      %671 = vmatpush1.bf16.msra.mxu0 0
      %672 = vmatprep.subr.bf16.mxu0 0
      %673 = vmatpush1.bf16.msra.mxu0 0
      %674 = vmatprep.subr.bf16.mxu0 0
      %675 = vmatpush1.bf16.msra.mxu0 0
      %676 = vmatprep.subr.bf16.mxu0 0
      %677 = vmatpush1.bf16.msra.mxu0 0
      %678 = vmatprep.subr.bf16.mxu0 0
      %679 = vmatpush1.bf16.msra.mxu0 0
      %680 = vmatprep.mubr.bf16.mxu0 0
      %681 = vmatmul.mubr.bf16.gmra.mrb[0].mxu0 %v598
      %v682 = vpop.f32.mrb[0].mxu0
      %v683 = vadd.f32 0.0, %v682
      %v684 = vpop.f32.mrb[0].mxu0
      %v685 = vpop.f32.mrb[0].mxu0
      %v686 = vadd.f32 0.0, %v685
      %v687 = vpop.f32.mrb[0].mxu0
      %688 = vdwg.mxu0
      %v705 = vunpack.c.l.b16 %v552
      %v706 = vunpack.c.l.b16 %v553
      %v707 = vunpack.c.l.b16 %v554
      %v708 = vunpack.c.l.b16 %v555
      %v709 = vunpack.c.l.b16 %v556
      %v710 = vunpack.c.l.b16 %v557
      %v711 = vunpack.c.l.b16 %v558
      %v712 = vunpack.c.l.b16 %v559
      %v713 = vunpack.c.l.b16 %v560
      %v714 = vunpack.c.l.b16 %v561
      %v715 = vunpack.c.l.b16 %v562
      %v716 = vunpack.c.l.b16 %v563
      %v717 = vunpack.c.l.b16 %v564
      %v718 = vunpack.c.l.b16 %v565
      %v719 = vunpack.c.l.b16 %v566
      %v720 = vunpack.c.l.b16 %v567
      %v721 = vpack.c.b16 %v706, %v705
      %v722 = vpack.c.b16 %v708, %v707
      %v723 = vpack.c.b16 %v710, %v709
      %v724 = vpack.c.b16 %v712, %v711
      %v725 = vpack.c.b16 %v714, %v713
      %v726 = vpack.c.b16 %v716, %v715
      %v727 = vpack.c.b16 %v718, %v717
      %v728 = vpack.c.b16 %v720, %v719
      %737 = vmatprep.subr.bf16.mxu0 0
      %738 = vmatpush1.bf16.msra.mxu0 %v721
      %739 = vmatprep.subr.bf16.mxu0 0
      %740 = vmatpush1.bf16.msra.mxu0 %v722
      %741 = vmatprep.subr.bf16.mxu0 0
      %742 = vmatpush1.bf16.msra.mxu0 %v723
      %743 = vmatprep.subr.bf16.mxu0 0
      %744 = vmatpush1.bf16.msra.mxu0 %v724
      %745 = vmatprep.subr.bf16.mxu0 0
      %746 = vmatpush1.bf16.msra.mxu0 %v725
      %747 = vmatprep.subr.bf16.mxu0 0
      %748 = vmatpush1.bf16.msra.mxu0 %v726
      %749 = vmatprep.subr.bf16.mxu0 0
      %750 = vmatpush1.bf16.msra.mxu0 %v727
      %751 = vmatprep.subr.bf16.mxu0 0
      %752 = vmatpush1.bf16.msra.mxu0 %v728
      %753 = vmatprep.subr.bf16.mxu0 0
      %754 = vmatpush1.bf16.msra.mxu0 0
      %755 = vmatprep.subr.bf16.mxu0 0
      %756 = vmatpush1.bf16.msra.mxu0 0
      %757 = vmatprep.subr.bf16.mxu0 0
      %758 = vmatpush1.bf16.msra.mxu0 0
      %759 = vmatprep.subr.bf16.mxu0 0
      %760 = vmatpush1.bf16.msra.mxu0 0
      %761 = vmatprep.subr.bf16.mxu0 0
      %762 = vmatpush1.bf16.msra.mxu0 0
      %763 = vmatprep.subr.bf16.mxu0 0
      %764 = vmatpush1.bf16.msra.mxu0 0
      %765 = vmatprep.subr.bf16.mxu0 0
      %766 = vmatpush1.bf16.msra.mxu0 0
      %767 = vmatprep.subr.bf16.mxu0 0
      %768 = vmatpush1.bf16.msra.mxu0 0
      %769 = vmatprep.mubr.bf16.mxu0 0
      %770 = vmatmul.mubr.bf16.gmra.mrb[0].mxu0 %v551
      %v771 = vpop.f32.mrb[0].mxu0
      %v772 = vadd.f32 %v683, %v771
      %v773 = vpop.f32.mrb[0].mxu0
      %v774 = vpop.f32.mrb[0].mxu0
      %v775 = vadd.f32 %v686, %v774
      %v776 = vpop.f32.mrb[0].mxu0
      %777 = vdwg.mxu0
      %s778 = scalar_lea.vmem %s1, 128
      %v779 = vld [vmem:[%s778] sm:$0xf]
      %v780 = vld [vmem:[%s778 + $0x4] sm:$0xf]
      %v781 = vld [vmem:[%s778 + $0x8] sm:$0xf]
      %v782 = vld [vmem:[%s778 + $0xc] sm:$0xf]
      %v783 = vld [vmem:[%s778 + $0x10] sm:$0xf]
      %v784 = vld [vmem:[%s778 + $0x14] sm:$0xf]
      %v785 = vld [vmem:[%s778 + $0x18] sm:$0xf]
      %v786 = vld [vmem:[%s778 + $0x1c] sm:$0xf]
      %v787 = vld [vmem:[%s778 + $0x20] sm:$0xf]
      %v788 = vld [vmem:[%s778 + $0x24] sm:$0xf]
      %v789 = vld [vmem:[%s778 + $0x28] sm:$0xf]
      %v790 = vld [vmem:[%s778 + $0x2c] sm:$0xf]
      %v791 = vld [vmem:[%s778 + $0x30] sm:$0xf]
      %v792 = vld [vmem:[%s778 + $0x34] sm:$0xf]
      %v793 = vld [vmem:[%s778 + $0x38] sm:$0xf]
      %v794 = vld [vmem:[%s778 + $0x3c] sm:$0xf]
      %vm797 = vcmask 1046528
      %v798 = vrot.slane %v551, 1
      %v799 = vrot.slane %v568, 1
      %v800 = vsel %vm797, %v798, %v799
      %v818 = vunpack.c.l.b16 %v779
      %v819 = vunpack.c.l.b16 %v780
      %v820 = vunpack.c.l.b16 %v781
      %v821 = vunpack.c.l.b16 %v782
      %v822 = vunpack.c.l.b16 %v783
      %v823 = vunpack.c.l.b16 %v784
      %v824 = vunpack.c.l.b16 %v785
      %v825 = vunpack.c.l.b16 %v786
      %v826 = vunpack.c.l.b16 %v787
      %v827 = vunpack.c.l.b16 %v788
      %v828 = vunpack.c.l.b16 %v789
      %v829 = vunpack.c.l.b16 %v790
      %v830 = vunpack.c.l.b16 %v791
      %v831 = vunpack.c.l.b16 %v792
      %v832 = vunpack.c.l.b16 %v793
      %v833 = vunpack.c.l.b16 %v794
      %v834 = vpack.c.b16 %v819, %v818
      %v835 = vpack.c.b16 %v821, %v820
      %v836 = vpack.c.b16 %v823, %v822
      %v837 = vpack.c.b16 %v825, %v824
      %v838 = vpack.c.b16 %v827, %v826
      %v839 = vpack.c.b16 %v829, %v828
      %v840 = vpack.c.b16 %v831, %v830
      %v841 = vpack.c.b16 %v833, %v832
      %850 = vmatprep.subr.bf16.mxu0 0
      %851 = vmatpush1.bf16.msra.mxu0 %v834
      %852 = vmatprep.subr.bf16.mxu0 0
      %853 = vmatpush1.bf16.msra.mxu0 %v835
      %854 = vmatprep.subr.bf16.mxu0 0
      %855 = vmatpush1.bf16.msra.mxu0 %v836
      %856 = vmatprep.subr.bf16.mxu0 0
      %857 = vmatpush1.bf16.msra.mxu0 %v837
      %858 = vmatprep.subr.bf16.mxu0 0
      %859 = vmatpush1.bf16.msra.mxu0 %v838
      %860 = vmatprep.subr.bf16.mxu0 0
      %861 = vmatpush1.bf16.msra.mxu0 %v839
      %862 = vmatprep.subr.bf16.mxu0 0
      %863 = vmatpush1.bf16.msra.mxu0 %v840
      %864 = vmatprep.subr.bf16.mxu0 0
      %865 = vmatpush1.bf16.msra.mxu0 %v841
      %866 = vmatprep.subr.bf16.mxu0 0
      %867 = vmatpush1.bf16.msra.mxu0 0
      %868 = vmatprep.subr.bf16.mxu0 0
      %869 = vmatpush1.bf16.msra.mxu0 0
      %870 = vmatprep.subr.bf16.mxu0 0
      %871 = vmatpush1.bf16.msra.mxu0 0
      %872 = vmatprep.subr.bf16.mxu0 0
      %873 = vmatpush1.bf16.msra.mxu0 0
      %874 = vmatprep.subr.bf16.mxu0 0
      %875 = vmatpush1.bf16.msra.mxu0 0
      %876 = vmatprep.subr.bf16.mxu0 0
      %877 = vmatpush1.bf16.msra.mxu0 0
      %878 = vmatprep.subr.bf16.mxu0 0
      %879 = vmatpush1.bf16.msra.mxu0 0
      %880 = vmatprep.subr.bf16.mxu0 0
      %881 = vmatpush1.bf16.msra.mxu0 0
      %882 = vmatprep.mubr.bf16.mxu0 0
      %883 = vmatmul.mubr.bf16.gmra.mrb[0].mxu0 %v800
      %v884 = vpop.f32.mrb[0].mxu0
      %v885 = vadd.f32 0.0, %v884
      %v886 = vpop.f32.mrb[0].mxu0
      %v887 = vpop.f32.mrb[0].mxu0
      %v888 = vadd.f32 0.0, %v887
      %v889 = vpop.f32.mrb[0].mxu0
      %890 = vdwg.mxu0
      %v891 = vadd.f32 %v772, %v885
      %v892 = vadd.f32 %v775, %v888
      %v893 = vld [vmem:[%s2] sm:$0x1]
      %v895 = vlaneseq
      %v896 = vshrl.u32 %v895, 7
      %v897 = vsub.s32 0, %v896
      %v898 = vrot.slane %v893, %v897
      %v900 = vmul.f32 %v891, %v898
      %v901 = vmul.f32 %v892, %v898
      %v902 = vld [vmem:[%s3] sm:$0x1]
      %v904 = vlaneseq
      %v905 = vshrl.u32 %v904, 7
      %v906 = vsub.s32 0, %v905
      %v907 = vrot.slane %v902, %v906
      %v909 = vadd.f32 %v900, %v907
      %v910 = vadd.f32 %v901, %v907
      %vm911 = vcmp.ge.f32.partialorder %v909, 0.0
      %vm912 = vcmp.ge.f32.partialorder %v910, 0.0
      %v913 = vmul.f32 %v909, 0.2
      %v914 = vmul.f32 %v910, 0.2
      %v915 = vsel %vm911, %v909, %v913
      %v916 = vsel %vm912, %v910, %v914
      %917 = vst [vmem:[#allocation2] sm:$0x1] 0.0
      %918 = vst [vmem:[#allocation2 + $0x11] sm:$0x1] 0.0
      %919 = vst [vmem:[#allocation2 + $0x1] sm:$0xff] %v915
      %920 = vst [vmem:[#allocation2 + $0x9] sm:$0xff] %v916
      %v921 = vld [vmem:[#allocation2] ss:$2 sm:$0xff]
      %v922 = vpack.c.bf16 %v921, %v921
      %v923 = vld [vmem:[%s4] sm:$0xf]
      %v924 = vld [vmem:[%s4 + $0x4] sm:$0xf]
      %v925 = vld [vmem:[%s4 + $0x8] sm:$0xf]
      %v926 = vld [vmem:[%s4 + $0xc] sm:$0xf]
      %v927 = vld [vmem:[%s4 + $0x10] sm:$0xf]
      %v928 = vld [vmem:[%s4 + $0x14] sm:$0xf]
      %v929 = vld [vmem:[%s4 + $0x18] sm:$0xf]
      %v930 = vld [vmem:[%s4 + $0x1c] sm:$0xf]
      %v931 = vld [vmem:[%s4 + $0x20] sm:$0xf]
      %v932 = vld [vmem:[%s4 + $0x24] sm:$0xf]
      %v933 = vld [vmem:[%s4 + $0x28] sm:$0xf]
      %v934 = vld [vmem:[%s4 + $0x2c] sm:$0xf]
      %v935 = vld [vmem:[%s4 + $0x30] sm:$0xf]
      %v936 = vld [vmem:[%s4 + $0x34] sm:$0xf]
      %v937 = vld [vmem:[%s4 + $0x38] sm:$0xf]
      %v938 = vld [vmem:[%s4 + $0x3c] sm:$0xf]
      %s939 = scalar_lea.vmem [#allocation2], 1
      %v940 = vld [vmem:[%s939] ss:$2 sm:$0xff]
      %v941 = vpack.c.bf16 %v940, %v940
      %s942 = scalar_lea.vmem %s4, 64
      %v943 = vld [vmem:[%s942] sm:$0xf]
      %v944 = vld [vmem:[%s942 + $0x4] sm:$0xf]
      %v945 = vld [vmem:[%s942 + $0x8] sm:$0xf]
      %v946 = vld [vmem:[%s942 + $0xc] sm:$0xf]
      %v947 = vld [vmem:[%s942 + $0x10] sm:$0xf]
      %v948 = vld [vmem:[%s942 + $0x14] sm:$0xf]
      %v949 = vld [vmem:[%s942 + $0x18] sm:$0xf]
      %v950 = vld [vmem:[%s942 + $0x1c] sm:$0xf]
      %v951 = vld [vmem:[%s942 + $0x20] sm:$0xf]
      %v952 = vld [vmem:[%s942 + $0x24] sm:$0xf]
      %v953 = vld [vmem:[%s942 + $0x28] sm:$0xf]
      %v954 = vld [vmem:[%s942 + $0x2c] sm:$0xf]
      %v955 = vld [vmem:[%s942 + $0x30] sm:$0xf]
      %v956 = vld [vmem:[%s942 + $0x34] sm:$0xf]
      %v957 = vld [vmem:[%s942 + $0x38] sm:$0xf]
      %v958 = vld [vmem:[%s942 + $0x3c] sm:$0xf]
      %v975 = vunpack.c.l.b16 %v943
      %v976 = vunpack.c.l.b16 %v944
      %v977 = vunpack.c.l.b16 %v945
      %v978 = vunpack.c.l.b16 %v946
      %v979 = vunpack.c.l.b16 %v947
      %v980 = vunpack.c.l.b16 %v948
      %v981 = vunpack.c.l.b16 %v949
      %v982 = vunpack.c.l.b16 %v950
      %v983 = vunpack.c.l.b16 %v951
      %v984 = vunpack.c.l.b16 %v952
      %v985 = vunpack.c.l.b16 %v953
      %v986 = vunpack.c.l.b16 %v954
      %v987 = vunpack.c.l.b16 %v955
      %v988 = vunpack.c.l.b16 %v956
      %v989 = vunpack.c.l.b16 %v957
      %v990 = vunpack.c.l.b16 %v958
      %v991 = vpack.c.b16 %v976, %v975
      %v992 = vpack.c.b16 %v978, %v977
      %v993 = vpack.c.b16 %v980, %v979
      %v994 = vpack.c.b16 %v982, %v981
      %v995 = vpack.c.b16 %v984, %v983
      %v996 = vpack.c.b16 %v986, %v985
      %v997 = vpack.c.b16 %v988, %v987
      %v998 = vpack.c.b16 %v990, %v989
      %1007 = vmatprep.subr.bf16.mxu0 0
      %1008 = vmatpush1.bf16.msra.mxu0 %v991
      %1009 = vmatprep.subr.bf16.mxu0 0
      %1010 = vmatpush1.bf16.msra.mxu0 %v992
      %1011 = vmatprep.subr.bf16.mxu0 0
      %1012 = vmatpush1.bf16.msra.mxu0 %v993
      %1013 = vmatprep.subr.bf16.mxu0 0
      %1014 = vmatpush1.bf16.msra.mxu0 %v994
      %1015 = vmatprep.subr.bf16.mxu0 0
      %1016 = vmatpush1.bf16.msra.mxu0 %v995
      %1017 = vmatprep.subr.bf16.mxu0 0
      %1018 = vmatpush1.bf16.msra.mxu0 %v996
      %1019 = vmatprep.subr.bf16.mxu0 0
      %1020 = vmatpush1.bf16.msra.mxu0 %v997
      %1021 = vmatprep.subr.bf16.mxu0 0
      %1022 = vmatpush1.bf16.msra.mxu0 %v998
      %1023 = vmatprep.subr.bf16.mxu0 0
      %1024 = vmatpush1.bf16.msra.mxu0 0
      %1025 = vmatprep.subr.bf16.mxu0 0
      %1026 = vmatpush1.bf16.msra.mxu0 0
      %1027 = vmatprep.subr.bf16.mxu0 0
      %1028 = vmatpush1.bf16.msra.mxu0 0
      %1029 = vmatprep.subr.bf16.mxu0 0
      %1030 = vmatpush1.bf16.msra.mxu0 0
      %1031 = vmatprep.subr.bf16.mxu0 0
      %1032 = vmatpush1.bf16.msra.mxu0 0
      %1033 = vmatprep.subr.bf16.mxu0 0
      %1034 = vmatpush1.bf16.msra.mxu0 0
      %1035 = vmatprep.subr.bf16.mxu0 0
      %1036 = vmatpush1.bf16.msra.mxu0 0
      %1037 = vmatprep.subr.bf16.mxu0 0
      %1038 = vmatpush1.bf16.msra.mxu0 0
      %1039 = vmatprep.mubr.bf16.mxu0 0
      %1040 = vmatmul.mubr.bf16.gmra.mrb[0].mxu0 %v941
      %v1041 = vpop.f32.mrb[0].mxu0
      %v1042 = vadd.f32 0.0, %v1041
      %v1043 = vpop.f32.mrb[0].mxu0
      %v1044 = vpop.f32.mrb[0].mxu0
      %v1045 = vpop.f32.mrb[0].mxu0
      %1046 = vdwg.mxu0
      %v1063 = vunpack.c.l.b16 %v923
      %v1064 = vunpack.c.l.b16 %v924
      %v1065 = vunpack.c.l.b16 %v925
      %v1066 = vunpack.c.l.b16 %v926
      %v1067 = vunpack.c.l.b16 %v927
      %v1068 = vunpack.c.l.b16 %v928
      %v1069 = vunpack.c.l.b16 %v929
      %v1070 = vunpack.c.l.b16 %v930
      %v1071 = vunpack.c.l.b16 %v931
      %v1072 = vunpack.c.l.b16 %v932
      %v1073 = vunpack.c.l.b16 %v933
      %v1074 = vunpack.c.l.b16 %v934
      %v1075 = vunpack.c.l.b16 %v935
      %v1076 = vunpack.c.l.b16 %v936
      %v1077 = vunpack.c.l.b16 %v937
      %v1078 = vunpack.c.l.b16 %v938
      %v1079 = vpack.c.b16 %v1064, %v1063
      %v1080 = vpack.c.b16 %v1066, %v1065
      %v1081 = vpack.c.b16 %v1068, %v1067
      %v1082 = vpack.c.b16 %v1070, %v1069
      %v1083 = vpack.c.b16 %v1072, %v1071
      %v1084 = vpack.c.b16 %v1074, %v1073
      %v1085 = vpack.c.b16 %v1076, %v1075
      %v1086 = vpack.c.b16 %v1078, %v1077
      %1095 = vmatprep.subr.bf16.mxu0 0
      %1096 = vmatpush1.bf16.msra.mxu0 %v1079
      %1097 = vmatprep.subr.bf16.mxu0 0
      %1098 = vmatpush1.bf16.msra.mxu0 %v1080
      %1099 = vmatprep.subr.bf16.mxu0 0
      %1100 = vmatpush1.bf16.msra.mxu0 %v1081
      %1101 = vmatprep.subr.bf16.mxu0 0
      %1102 = vmatpush1.bf16.msra.mxu0 %v1082
      %1103 = vmatprep.subr.bf16.mxu0 0
      %1104 = vmatpush1.bf16.msra.mxu0 %v1083
      %1105 = vmatprep.subr.bf16.mxu0 0
      %1106 = vmatpush1.bf16.msra.mxu0 %v1084
      %1107 = vmatprep.subr.bf16.mxu0 0
      %1108 = vmatpush1.bf16.msra.mxu0 %v1085
      %1109 = vmatprep.subr.bf16.mxu0 0
      %1110 = vmatpush1.bf16.msra.mxu0 %v1086
      %1111 = vmatprep.subr.bf16.mxu0 0
      %1112 = vmatpush1.bf16.msra.mxu0 0
      %1113 = vmatprep.subr.bf16.mxu0 0
      %1114 = vmatpush1.bf16.msra.mxu0 0
      %1115 = vmatprep.subr.bf16.mxu0 0
      %1116 = vmatpush1.bf16.msra.mxu0 0
      %1117 = vmatprep.subr.bf16.mxu0 0
      %1118 = vmatpush1.bf16.msra.mxu0 0
      %1119 = vmatprep.subr.bf16.mxu0 0
      %1120 = vmatpush1.bf16.msra.mxu0 0
      %1121 = vmatprep.subr.bf16.mxu0 0
      %1122 = vmatpush1.bf16.msra.mxu0 0
      %1123 = vmatprep.subr.bf16.mxu0 0
      %1124 = vmatpush1.bf16.msra.mxu0 0
      %1125 = vmatprep.subr.bf16.mxu0 0
      %1126 = vmatpush1.bf16.msra.mxu0 0
      %1127 = vmatprep.mubr.bf16.mxu0 0
      %1128 = vmatmul.mubr.bf16.gmra.mrb[0].mxu0 %v922
      %v1129 = vpop.f32.mrb[0].mxu0
      %v1130 = vadd.f32 %v1042, %v1129
      %v1131 = vpop.f32.mrb[0].mxu0
      %v1132 = vpop.f32.mrb[0].mxu0
      %v1133 = vpop.f32.mrb[0].mxu0
      %1134 = vdwg.mxu0
      %s1135 = scalar_lea.vmem [#allocation2], 2
      %v1136 = vld [vmem:[%s1135] ss:$2 sm:$0xff]
      %v1137 = vpack.c.bf16 %v1136, %v1136
      %s1138 = scalar_lea.vmem %s4, 128
      %v1139 = vld [vmem:[%s1138] sm:$0xf]
      %v1140 = vld [vmem:[%s1138 + $0x4] sm:$0xf]
      %v1141 = vld [vmem:[%s1138 + $0x8] sm:$0xf]
      %v1142 = vld [vmem:[%s1138 + $0xc] sm:$0xf]
      %v1143 = vld [vmem:[%s1138 + $0x10] sm:$0xf]
      %v1144 = vld [vmem:[%s1138 + $0x14] sm:$0xf]
      %v1145 = vld [vmem:[%s1138 + $0x18] sm:$0xf]
      %v1146 = vld [vmem:[%s1138 + $0x1c] sm:$0xf]
      %v1147 = vld [vmem:[%s1138 + $0x20] sm:$0xf]
      %v1148 = vld [vmem:[%s1138 + $0x24] sm:$0xf]
      %v1149 = vld [vmem:[%s1138 + $0x28] sm:$0xf]
      %v1150 = vld [vmem:[%s1138 + $0x2c] sm:$0xf]
      %v1151 = vld [vmem:[%s1138 + $0x30] sm:$0xf]
      %v1152 = vld [vmem:[%s1138 + $0x34] sm:$0xf]
      %v1153 = vld [vmem:[%s1138 + $0x38] sm:$0xf]
      %v1154 = vld [vmem:[%s1138 + $0x3c] sm:$0xf]
      %v1171 = vunpack.c.l.b16 %v1139
      %v1172 = vunpack.c.l.b16 %v1140
      %v1173 = vunpack.c.l.b16 %v1141
      %v1174 = vunpack.c.l.b16 %v1142
      %v1175 = vunpack.c.l.b16 %v1143
      %v1176 = vunpack.c.l.b16 %v1144
      %v1177 = vunpack.c.l.b16 %v1145
      %v1178 = vunpack.c.l.b16 %v1146
      %v1179 = vunpack.c.l.b16 %v1147
      %v1180 = vunpack.c.l.b16 %v1148
      %v1181 = vunpack.c.l.b16 %v1149
      %v1182 = vunpack.c.l.b16 %v1150
      %v1183 = vunpack.c.l.b16 %v1151
      %v1184 = vunpack.c.l.b16 %v1152
      %v1185 = vunpack.c.l.b16 %v1153
      %v1186 = vunpack.c.l.b16 %v1154
      %v1187 = vpack.c.b16 %v1172, %v1171
      %v1188 = vpack.c.b16 %v1174, %v1173
      %v1189 = vpack.c.b16 %v1176, %v1175
      %v1190 = vpack.c.b16 %v1178, %v1177
      %v1191 = vpack.c.b16 %v1180, %v1179
      %v1192 = vpack.c.b16 %v1182, %v1181
      %v1193 = vpack.c.b16 %v1184, %v1183
      %v1194 = vpack.c.b16 %v1186, %v1185
      %1203 = vmatprep.subr.bf16.mxu0 0
      %1204 = vmatpush1.bf16.msra.mxu0 %v1187
      %1205 = vmatprep.subr.bf16.mxu0 0
      %1206 = vmatpush1.bf16.msra.mxu0 %v1188
      %1207 = vmatprep.subr.bf16.mxu0 0
      %1208 = vmatpush1.bf16.msra.mxu0 %v1189
      %1209 = vmatprep.subr.bf16.mxu0 0
      %1210 = vmatpush1.bf16.msra.mxu0 %v1190
      %1211 = vmatprep.subr.bf16.mxu0 0
      %1212 = vmatpush1.bf16.msra.mxu0 %v1191
      %1213 = vmatprep.subr.bf16.mxu0 0
      %1214 = vmatpush1.bf16.msra.mxu0 %v1192
      %1215 = vmatprep.subr.bf16.mxu0 0
      %1216 = vmatpush1.bf16.msra.mxu0 %v1193
      %1217 = vmatprep.subr.bf16.mxu0 0
      %1218 = vmatpush1.bf16.msra.mxu0 %v1194
      %1219 = vmatprep.subr.bf16.mxu0 0
      %1220 = vmatpush1.bf16.msra.mxu0 0
      %1221 = vmatprep.subr.bf16.mxu0 0
      %1222 = vmatpush1.bf16.msra.mxu0 0
      %1223 = vmatprep.subr.bf16.mxu0 0
      %1224 = vmatpush1.bf16.msra.mxu0 0
      %1225 = vmatprep.subr.bf16.mxu0 0
      %1226 = vmatpush1.bf16.msra.mxu0 0
      %1227 = vmatprep.subr.bf16.mxu0 0
      %1228 = vmatpush1.bf16.msra.mxu0 0
      %1229 = vmatprep.subr.bf16.mxu0 0
      %1230 = vmatpush1.bf16.msra.mxu0 0
      %1231 = vmatprep.subr.bf16.mxu0 0
      %1232 = vmatpush1.bf16.msra.mxu0 0
      %1233 = vmatprep.subr.bf16.mxu0 0
      %1234 = vmatpush1.bf16.msra.mxu0 0
      %1235 = vmatprep.mubr.bf16.mxu0 0
      %1236 = vmatmul.mubr.bf16.gmra.mrb[0].mxu0 %v1137
      %v1237 = vpop.f32.mrb[0].mxu0
      %v1238 = vadd.f32 0.0, %v1237
      %v1239 = vpop.f32.mrb[0].mxu0
      %v1240 = vpop.f32.mrb[0].mxu0
      %v1241 = vpop.f32.mrb[0].mxu0
      %1242 = vdwg.mxu0
      %v1243 = vadd.f32 %v1130, %v1238
      %v1244 = vld [vmem:[%s5] sm:$0x1]
      %v1246 = vlaneseq
      %v1247 = vshrl.u32 %v1246, 7
      %v1248 = vsub.s32 0, %v1247
      %v1249 = vrot.slane %v1244, %v1248
      %v1251 = vmul.f32 %v1243, %v1249
      %v1252 = vld [vmem:[%s6] sm:$0x1]
      %v1254 = vlaneseq
      %v1255 = vshrl.u32 %v1254, 7
      %v1256 = vsub.s32 0, %v1255
      %v1257 = vrot.slane %v1252, %v1256
      %v1259 = vadd.f32 %v1251, %v1257
      %vm1260 = vcmp.ge.f32.partialorder %v1259, 0.0
      %v1261 = vmul.f32 %v1259, 0.2
      %v1262 = vsel %vm1260, %v1259, %v1261
      %1263 = vst [vmem:[#allocation3] sm:$0x1] 0.0
      %1264 = vst [vmem:[#allocation3 + $0x9] sm:$0x1] 0.0
      %1265 = vst [vmem:[#allocation3 + $0x1] sm:$0xff] %v1262
      %v1266 = vld [vmem:[#allocation3] sm:$0xff]
      %v1267 = vpack.c.bf16 %v1266, %v1266
      %v1268 = vld [vmem:[%s7] sm:$0xf]
      %v1269 = vld [vmem:[%s7 + $0x4] sm:$0xf]
      %v1270 = vld [vmem:[%s7 + $0x8] sm:$0xf]
      %v1271 = vld [vmem:[%s7 + $0xc] sm:$0xf]
      %v1272 = vld [vmem:[%s7 + $0x10] sm:$0xf]
      %v1273 = vld [vmem:[%s7 + $0x14] sm:$0xf]
      %v1274 = vld [vmem:[%s7 + $0x18] sm:$0xf]
      %v1275 = vld [vmem:[%s7 + $0x1c] sm:$0xf]
      %v1276 = vld [vmem:[%s7 + $0x20] sm:$0xf]
      %v1277 = vld [vmem:[%s7 + $0x24] sm:$0xf]
      %v1278 = vld [vmem:[%s7 + $0x28] sm:$0xf]
      %v1279 = vld [vmem:[%s7 + $0x2c] sm:$0xf]
      %v1280 = vld [vmem:[%s7 + $0x30] sm:$0xf]
      %v1281 = vld [vmem:[%s7 + $0x34] sm:$0xf]
      %v1282 = vld [vmem:[%s7 + $0x38] sm:$0xf]
      %v1283 = vld [vmem:[%s7 + $0x3c] sm:$0xf]
      %v1284 = vld [vmem:[#allocation3 + $0x1] sm:$0xff]
      %v1285 = vpack.c.bf16 %v1284, %v1284
      %s1286 = scalar_lea.vmem %s7, 64
      %v1287 = vld [vmem:[%s1286] sm:$0xf]
      %v1288 = vld [vmem:[%s1286 + $0x4] sm:$0xf]
      %v1289 = vld [vmem:[%s1286 + $0x8] sm:$0xf]
      %v1290 = vld [vmem:[%s1286 + $0xc] sm:$0xf]
      %v1291 = vld [vmem:[%s1286 + $0x10] sm:$0xf]
      %v1292 = vld [vmem:[%s1286 + $0x14] sm:$0xf]
      %v1293 = vld [vmem:[%s1286 + $0x18] sm:$0xf]
      %v1294 = vld [vmem:[%s1286 + $0x1c] sm:$0xf]
      %v1295 = vld [vmem:[%s1286 + $0x20] sm:$0xf]
      %v1296 = vld [vmem:[%s1286 + $0x24] sm:$0xf]
      %v1297 = vld [vmem:[%s1286 + $0x28] sm:$0xf]
      %v1298 = vld [vmem:[%s1286 + $0x2c] sm:$0xf]
      %v1299 = vld [vmem:[%s1286 + $0x30] sm:$0xf]
      %v1300 = vld [vmem:[%s1286 + $0x34] sm:$0xf]
      %v1301 = vld [vmem:[%s1286 + $0x38] sm:$0xf]
      %v1302 = vld [vmem:[%s1286 + $0x3c] sm:$0xf]
      %v1319 = vunpack.c.l.b16 %v1287
      %v1320 = vunpack.c.l.b16 %v1288
      %v1321 = vunpack.c.l.b16 %v1289
      %v1322 = vunpack.c.l.b16 %v1290
      %v1323 = vunpack.c.l.b16 %v1291
      %v1324 = vunpack.c.l.b16 %v1292
      %v1325 = vunpack.c.l.b16 %v1293
      %v1326 = vunpack.c.l.b16 %v1294
      %v1327 = vunpack.c.l.b16 %v1295
      %v1328 = vunpack.c.l.b16 %v1296
      %v1329 = vunpack.c.l.b16 %v1297
      %v1330 = vunpack.c.l.b16 %v1298
      %v1331 = vunpack.c.l.b16 %v1299
      %v1332 = vunpack.c.l.b16 %v1300
      %v1333 = vunpack.c.l.b16 %v1301
      %v1334 = vunpack.c.l.b16 %v1302
      %v1335 = vpack.c.b16 %v1320, %v1319
      %v1336 = vpack.c.b16 %v1322, %v1321
      %v1337 = vpack.c.b16 %v1324, %v1323
      %v1338 = vpack.c.b16 %v1326, %v1325
      %v1339 = vpack.c.b16 %v1328, %v1327
      %v1340 = vpack.c.b16 %v1330, %v1329
      %v1341 = vpack.c.b16 %v1332, %v1331
      %v1342 = vpack.c.b16 %v1334, %v1333
      %1351 = vmatprep.subr.bf16.mxu0 0
      %1352 = vmatpush1.bf16.msra.mxu0 %v1335
      %1353 = vmatprep.subr.bf16.mxu0 0
      %1354 = vmatpush1.bf16.msra.mxu0 %v1336
      %1355 = vmatprep.subr.bf16.mxu0 0
      %1356 = vmatpush1.bf16.msra.mxu0 %v1337
      %1357 = vmatprep.subr.bf16.mxu0 0
      %1358 = vmatpush1.bf16.msra.mxu0 %v1338
      %1359 = vmatprep.subr.bf16.mxu0 0
      %1360 = vmatpush1.bf16.msra.mxu0 %v1339
      %1361 = vmatprep.subr.bf16.mxu0 0
      %1362 = vmatpush1.bf16.msra.mxu0 %v1340
      %1363 = vmatprep.subr.bf16.mxu0 0
      %1364 = vmatpush1.bf16.msra.mxu0 %v1341
      %1365 = vmatprep.subr.bf16.mxu0 0
      %1366 = vmatpush1.bf16.msra.mxu0 %v1342
      %1367 = vmatprep.subr.bf16.mxu0 0
      %1368 = vmatpush1.bf16.msra.mxu0 0
      %1369 = vmatprep.subr.bf16.mxu0 0
      %1370 = vmatpush1.bf16.msra.mxu0 0
      %1371 = vmatprep.subr.bf16.mxu0 0
      %1372 = vmatpush1.bf16.msra.mxu0 0
      %1373 = vmatprep.subr.bf16.mxu0 0
      %1374 = vmatpush1.bf16.msra.mxu0 0
      %1375 = vmatprep.subr.bf16.mxu0 0
      %1376 = vmatpush1.bf16.msra.mxu0 0
      %1377 = vmatprep.subr.bf16.mxu0 0
      %1378 = vmatpush1.bf16.msra.mxu0 0
      %1379 = vmatprep.subr.bf16.mxu0 0
      %1380 = vmatpush1.bf16.msra.mxu0 0
      %1381 = vmatprep.subr.bf16.mxu0 0
      %1382 = vmatpush1.bf16.msra.mxu0 0
      %1383 = vmatprep.mubr.bf16.mxu0 0
      %1384 = vmatmul.mubr.bf16.gmra.mrb[0].mxu0 %v1285
      %v1385 = vpop.f32.mrb[0].mxu0
      %v1386 = vadd.f32 0.0, %v1385
      %v1387 = vpop.f32.mrb[0].mxu0
      %v1388 = vpop.f32.mrb[0].mxu0
      %v1389 = vpop.f32.mrb[0].mxu0
      %1390 = vdwg.mxu0
      %v1407 = vunpack.c.l.b16 %v1268
      %v1408 = vunpack.c.l.b16 %v1269
      %v1409 = vunpack.c.l.b16 %v1270
      %v1410 = vunpack.c.l.b16 %v1271
      %v1411 = vunpack.c.l.b16 %v1272
      %v1412 = vunpack.c.l.b16 %v1273
      %v1413 = vunpack.c.l.b16 %v1274
      %v1414 = vunpack.c.l.b16 %v1275
      %v1415 = vunpack.c.l.b16 %v1276
      %v1416 = vunpack.c.l.b16 %v1277
      %v1417 = vunpack.c.l.b16 %v1278
      %v1418 = vunpack.c.l.b16 %v1279
      %v1419 = vunpack.c.l.b16 %v1280
      %v1420 = vunpack.c.l.b16 %v1281
      %v1421 = vunpack.c.l.b16 %v1282
      %v1422 = vunpack.c.l.b16 %v1283
      %v1423 = vpack.c.b16 %v1408, %v1407
      %v1424 = vpack.c.b16 %v1410, %v1409
      %v1425 = vpack.c.b16 %v1412, %v1411
      %v1426 = vpack.c.b16 %v1414, %v1413
      %v1427 = vpack.c.b16 %v1416, %v1415
      %v1428 = vpack.c.b16 %v1418, %v1417
      %v1429 = vpack.c.b16 %v1420, %v1419
      %v1430 = vpack.c.b16 %v1422, %v1421
      %1439 = vmatprep.subr.bf16.mxu0 0
      %1440 = vmatpush1.bf16.msra.mxu0 %v1423
      %1441 = vmatprep.subr.bf16.mxu0 0
      %1442 = vmatpush1.bf16.msra.mxu0 %v1424
      %1443 = vmatprep.subr.bf16.mxu0 0
      %1444 = vmatpush1.bf16.msra.mxu0 %v1425
      %1445 = vmatprep.subr.bf16.mxu0 0
      %1446 = vmatpush1.bf16.msra.mxu0 %v1426
      %1447 = vmatprep.subr.bf16.mxu0 0
      %1448 = vmatpush1.bf16.msra.mxu0 %v1427
      %1449 = vmatprep.subr.bf16.mxu0 0
      %1450 = vmatpush1.bf16.msra.mxu0 %v1428
      %1451 = vmatprep.subr.bf16.mxu0 0
      %1452 = vmatpush1.bf16.msra.mxu0 %v1429
      %1453 = vmatprep.subr.bf16.mxu0 0
      %1454 = vmatpush1.bf16.msra.mxu0 %v1430
      %1455 = vmatprep.subr.bf16.mxu0 0
      %1456 = vmatpush1.bf16.msra.mxu0 0
      %1457 = vmatprep.subr.bf16.mxu0 0
      %1458 = vmatpush1.bf16.msra.mxu0 0
      %1459 = vmatprep.subr.bf16.mxu0 0
      %1460 = vmatpush1.bf16.msra.mxu0 0
      %1461 = vmatprep.subr.bf16.mxu0 0
      %1462 = vmatpush1.bf16.msra.mxu0 0
      %1463 = vmatprep.subr.bf16.mxu0 0
      %1464 = vmatpush1.bf16.msra.mxu0 0
      %1465 = vmatprep.subr.bf16.mxu0 0
      %1466 = vmatpush1.bf16.msra.mxu0 0
      %1467 = vmatprep.subr.bf16.mxu0 0
      %1468 = vmatpush1.bf16.msra.mxu0 0
      %1469 = vmatprep.subr.bf16.mxu0 0
      %1470 = vmatpush1.bf16.msra.mxu0 0
      %1471 = vmatprep.mubr.bf16.mxu0 0
      %1472 = vmatmul.mubr.bf16.gmra.mrb[0].mxu0 %v1267
      %v1473 = vpop.f32.mrb[0].mxu0
      %v1474 = vadd.f32 %v1386, %v1473
      %v1475 = vpop.f32.mrb[0].mxu0
      %v1476 = vpop.f32.mrb[0].mxu0
      %v1477 = vpop.f32.mrb[0].mxu0
      %1478 = vdwg.mxu0
      %v1479 = vld [vmem:[#allocation3 + $0x2] sm:$0xff]
      %v1480 = vpack.c.bf16 %v1479, %v1479
      %s1481 = scalar_lea.vmem %s7, 128
      %v1482 = vld [vmem:[%s1481] sm:$0xf]
      %v1483 = vld [vmem:[%s1481 + $0x4] sm:$0xf]
      %v1484 = vld [vmem:[%s1481 + $0x8] sm:$0xf]
      %v1485 = vld [vmem:[%s1481 + $0xc] sm:$0xf]
      %v1486 = vld [vmem:[%s1481 + $0x10] sm:$0xf]
      %v1487 = vld [vmem:[%s1481 + $0x14] sm:$0xf]
      %v1488 = vld [vmem:[%s1481 + $0x18] sm:$0xf]
      %v1489 = vld [vmem:[%s1481 + $0x1c] sm:$0xf]
      %v1490 = vld [vmem:[%s1481 + $0x20] sm:$0xf]
      %v1491 = vld [vmem:[%s1481 + $0x24] sm:$0xf]
      %v1492 = vld [vmem:[%s1481 + $0x28] sm:$0xf]
      %v1493 = vld [vmem:[%s1481 + $0x2c] sm:$0xf]
      %v1494 = vld [vmem:[%s1481 + $0x30] sm:$0xf]
      %v1495 = vld [vmem:[%s1481 + $0x34] sm:$0xf]
      %v1496 = vld [vmem:[%s1481 + $0x38] sm:$0xf]
      %v1497 = vld [vmem:[%s1481 + $0x3c] sm:$0xf]
      %v1514 = vunpack.c.l.b16 %v1482
      %v1515 = vunpack.c.l.b16 %v1483
      %v1516 = vunpack.c.l.b16 %v1484
      %v1517 = vunpack.c.l.b16 %v1485
      %v1518 = vunpack.c.l.b16 %v1486
      %v1519 = vunpack.c.l.b16 %v1487
      %v1520 = vunpack.c.l.b16 %v1488
      %v1521 = vunpack.c.l.b16 %v1489
      %v1522 = vunpack.c.l.b16 %v1490
      %v1523 = vunpack.c.l.b16 %v1491
      %v1524 = vunpack.c.l.b16 %v1492
      %v1525 = vunpack.c.l.b16 %v1493
      %v1526 = vunpack.c.l.b16 %v1494
      %v1527 = vunpack.c.l.b16 %v1495
      %v1528 = vunpack.c.l.b16 %v1496
      %v1529 = vunpack.c.l.b16 %v1497
      %v1530 = vpack.c.b16 %v1515, %v1514
      %v1531 = vpack.c.b16 %v1517, %v1516
      %v1532 = vpack.c.b16 %v1519, %v1518
      %v1533 = vpack.c.b16 %v1521, %v1520
      %v1534 = vpack.c.b16 %v1523, %v1522
      %v1535 = vpack.c.b16 %v1525, %v1524
      %v1536 = vpack.c.b16 %v1527, %v1526
      %v1537 = vpack.c.b16 %v1529, %v1528
      %1546 = vmatprep.subr.bf16.mxu0 0
      %1547 = vmatpush1.bf16.msra.mxu0 %v1530
      %1548 = vmatprep.subr.bf16.mxu0 0
      %1549 = vmatpush1.bf16.msra.mxu0 %v1531
      %1550 = vmatprep.subr.bf16.mxu0 0
      %1551 = vmatpush1.bf16.msra.mxu0 %v1532
      %1552 = vmatprep.subr.bf16.mxu0 0
      %1553 = vmatpush1.bf16.msra.mxu0 %v1533
      %1554 = vmatprep.subr.bf16.mxu0 0
      %1555 = vmatpush1.bf16.msra.mxu0 %v1534
      %1556 = vmatprep.subr.bf16.mxu0 0
      %1557 = vmatpush1.bf16.msra.mxu0 %v1535
      %1558 = vmatprep.subr.bf16.mxu0 0
      %1559 = vmatpush1.bf16.msra.mxu0 %v1536
      %1560 = vmatprep.subr.bf16.mxu0 0
      %1561 = vmatpush1.bf16.msra.mxu0 %v1537
      %1562 = vmatprep.subr.bf16.mxu0 0
      %1563 = vmatpush1.bf16.msra.mxu0 0
      %1564 = vmatprep.subr.bf16.mxu0 0
      %1565 = vmatpush1.bf16.msra.mxu0 0
      %1566 = vmatprep.subr.bf16.mxu0 0
      %1567 = vmatpush1.bf16.msra.mxu0 0
      %1568 = vmatprep.subr.bf16.mxu0 0
      %1569 = vmatpush1.bf16.msra.mxu0 0
      %1570 = vmatprep.subr.bf16.mxu0 0
      %1571 = vmatpush1.bf16.msra.mxu0 0
      %1572 = vmatprep.subr.bf16.mxu0 0
      %1573 = vmatpush1.bf16.msra.mxu0 0
      %1574 = vmatprep.subr.bf16.mxu0 0
      %1575 = vmatpush1.bf16.msra.mxu0 0
      %1576 = vmatprep.subr.bf16.mxu0 0
      %1577 = vmatpush1.bf16.msra.mxu0 0
      %1578 = vmatprep.mubr.bf16.mxu0 0
      %1579 = vmatmul.mubr.bf16.gmra.mrb[0].mxu0 %v1480
      %v1580 = vpop.f32.mrb[0].mxu0
      %v1581 = vadd.f32 0.0, %v1580
      %v1582 = vpop.f32.mrb[0].mxu0
      %v1583 = vpop.f32.mrb[0].mxu0
      %v1584 = vpop.f32.mrb[0].mxu0
      %1585 = vdwg.mxu0
      %v1586 = vadd.f32 %v1474, %v1581
      %v1587 = vld [vmem:[%s8] sm:$0x1]
      %v1589 = vlaneseq
      %v1590 = vshrl.u32 %v1589, 7
      %v1591 = vsub.s32 0, %v1590
      %v1592 = vrot.slane %v1587, %v1591
      %v1594 = vmul.f32 %v1586, %v1592
      %v1595 = vld [vmem:[%s9] sm:$0x1]
      %v1597 = vlaneseq
      %v1598 = vshrl.u32 %v1597, 7
      %v1599 = vsub.s32 0, %v1598
      %v1600 = vrot.slane %v1595, %v1599
      %v1602 = vadd.f32 %v1594, %v1600
      %vm1603 = vcmp.ge.f32.partialorder %v1602, 0.0
      %v1604 = vmul.f32 %v1602, 0.2
      %v1605 = vsel %vm1603, %v1602, %v1604
      %1606 = vst [vmem:[#allocation4] sm:$0x1] 0.0
      %1607 = vst [vmem:[#allocation4 + $0x9] sm:$0x1] 0.0
      %1608 = vst [vmem:[#allocation4 + $0x1] sm:$0xff] %v1605
      %v1609 = vld [vmem:[#allocation4] ss:$2 sm:$0xf]
      %v1610 = vpack.c.bf16 %v1609, %v1609
      %v1611 = vld [vmem:[%s10] sm:$0xf]
      %v1612 = vld [vmem:[%s10 + $0x4] sm:$0xf]
      %v1613 = vld [vmem:[%s10 + $0x8] sm:$0xf]
      %v1614 = vld [vmem:[%s10 + $0xc] sm:$0xf]
      %v1615 = vld [vmem:[%s10 + $0x10] sm:$0xf]
      %v1616 = vld [vmem:[%s10 + $0x14] sm:$0xf]
      %v1617 = vld [vmem:[%s10 + $0x18] sm:$0xf]
      %v1618 = vld [vmem:[%s10 + $0x1c] sm:$0xf]
      %v1619 = vld [vmem:[%s10 + $0x20] sm:$0xf]
      %v1620 = vld [vmem:[%s10 + $0x24] sm:$0xf]
      %v1621 = vld [vmem:[%s10 + $0x28] sm:$0xf]
      %v1622 = vld [vmem:[%s10 + $0x2c] sm:$0xf]
      %v1623 = vld [vmem:[%s10 + $0x30] sm:$0xf]
      %v1624 = vld [vmem:[%s10 + $0x34] sm:$0xf]
      %v1625 = vld [vmem:[%s10 + $0x38] sm:$0xf]
      %v1626 = vld [vmem:[%s10 + $0x3c] sm:$0xf]
      %s1627 = scalar_lea.vmem [#allocation4], 1
      %v1628 = vld [vmem:[%s1627] ss:$2 sm:$0xf]
      %v1629 = vpack.c.bf16 %v1628, %v1628
      %s1630 = scalar_lea.vmem %s10, 64
      %v1631 = vld [vmem:[%s1630] sm:$0xf]
      %v1632 = vld [vmem:[%s1630 + $0x4] sm:$0xf]
      %v1633 = vld [vmem:[%s1630 + $0x8] sm:$0xf]
      %v1634 = vld [vmem:[%s1630 + $0xc] sm:$0xf]
      %v1635 = vld [vmem:[%s1630 + $0x10] sm:$0xf]
      %v1636 = vld [vmem:[%s1630 + $0x14] sm:$0xf]
      %v1637 = vld [vmem:[%s1630 + $0x18] sm:$0xf]
      %v1638 = vld [vmem:[%s1630 + $0x1c] sm:$0xf]
      %v1639 = vld [vmem:[%s1630 + $0x20] sm:$0xf]
      %v1640 = vld [vmem:[%s1630 + $0x24] sm:$0xf]
      %v1641 = vld [vmem:[%s1630 + $0x28] sm:$0xf]
      %v1642 = vld [vmem:[%s1630 + $0x2c] sm:$0xf]
      %v1643 = vld [vmem:[%s1630 + $0x30] sm:$0xf]
      %v1644 = vld [vmem:[%s1630 + $0x34] sm:$0xf]
      %v1645 = vld [vmem:[%s1630 + $0x38] sm:$0xf]
      %v1646 = vld [vmem:[%s1630 + $0x3c] sm:$0xf]
      %v1663 = vunpack.c.l.b16 %v1631
      %v1664 = vunpack.c.l.b16 %v1632
      %v1665 = vunpack.c.l.b16 %v1633
      %v1666 = vunpack.c.l.b16 %v1634
      %v1667 = vunpack.c.l.b16 %v1635
      %v1668 = vunpack.c.l.b16 %v1636
      %v1669 = vunpack.c.l.b16 %v1637
      %v1670 = vunpack.c.l.b16 %v1638
      %v1671 = vunpack.c.l.b16 %v1639
      %v1672 = vunpack.c.l.b16 %v1640
      %v1673 = vunpack.c.l.b16 %v1641
      %v1674 = vunpack.c.l.b16 %v1642
      %v1675 = vunpack.c.l.b16 %v1643
      %v1676 = vunpack.c.l.b16 %v1644
      %v1677 = vunpack.c.l.b16 %v1645
      %v1678 = vunpack.c.l.b16 %v1646
      %v1679 = vpack.c.b16 %v1664, %v1663
      %v1680 = vpack.c.b16 %v1666, %v1665
      %v1681 = vpack.c.b16 %v1668, %v1667
      %v1682 = vpack.c.b16 %v1670, %v1669
      %v1683 = vpack.c.b16 %v1672, %v1671
      %v1684 = vpack.c.b16 %v1674, %v1673
      %v1685 = vpack.c.b16 %v1676, %v1675
      %v1686 = vpack.c.b16 %v1678, %v1677
      %1695 = vmatprep.subr.bf16.mxu0 0
      %1696 = vmatpush1.bf16.msra.mxu0 %v1679
      %1697 = vmatprep.subr.bf16.mxu0 0
      %1698 = vmatpush1.bf16.msra.mxu0 %v1680
      %1699 = vmatprep.subr.bf16.mxu0 0
      %1700 = vmatpush1.bf16.msra.mxu0 %v1681
      %1701 = vmatprep.subr.bf16.mxu0 0
      %1702 = vmatpush1.bf16.msra.mxu0 %v1682
      %1703 = vmatprep.subr.bf16.mxu0 0
      %1704 = vmatpush1.bf16.msra.mxu0 %v1683
      %1705 = vmatprep.subr.bf16.mxu0 0
      %1706 = vmatpush1.bf16.msra.mxu0 %v1684
      %1707 = vmatprep.subr.bf16.mxu0 0
      %1708 = vmatpush1.bf16.msra.mxu0 %v1685
      %1709 = vmatprep.subr.bf16.mxu0 0
      %1710 = vmatpush1.bf16.msra.mxu0 %v1686
      %1711 = vmatprep.subr.bf16.mxu0 0
      %1712 = vmatpush1.bf16.msra.mxu0 0
      %1713 = vmatprep.subr.bf16.mxu0 0
      %1714 = vmatpush1.bf16.msra.mxu0 0
      %1715 = vmatprep.subr.bf16.mxu0 0
      %1716 = vmatpush1.bf16.msra.mxu0 0
      %1717 = vmatprep.subr.bf16.mxu0 0
      %1718 = vmatpush1.bf16.msra.mxu0 0
      %1719 = vmatprep.subr.bf16.mxu0 0
      %1720 = vmatpush1.bf16.msra.mxu0 0
      %1721 = vmatprep.subr.bf16.mxu0 0
      %1722 = vmatpush1.bf16.msra.mxu0 0
      %1723 = vmatprep.subr.bf16.mxu0 0
      %1724 = vmatpush1.bf16.msra.mxu0 0
      %1725 = vmatprep.subr.bf16.mxu0 0
      %1726 = vmatpush1.bf16.msra.mxu0 0
      %1727 = vmatprep.mubr.bf16.mxu0 0
      %1728 = vmatmul.mubr.bf16.gmra.mrb[0].mxu0 %v1629
      %v1729 = vpop.f32.mrb[0].mxu0
      %v1730 = vadd.f32 0.0, %v1729
      %v1731 = vpop.f32.mrb[0].mxu0
      %v1732 = vpop.f32.mrb[0].mxu0
      %v1733 = vpop.f32.mrb[0].mxu0
      %1734 = vdwg.mxu0
      %v1751 = vunpack.c.l.b16 %v1611
      %v1752 = vunpack.c.l.b16 %v1612
      %v1753 = vunpack.c.l.b16 %v1613
      %v1754 = vunpack.c.l.b16 %v1614
      %v1755 = vunpack.c.l.b16 %v1615
      %v1756 = vunpack.c.l.b16 %v1616
      %v1757 = vunpack.c.l.b16 %v1617
      %v1758 = vunpack.c.l.b16 %v1618
      %v1759 = vunpack.c.l.b16 %v1619
      %v1760 = vunpack.c.l.b16 %v1620
      %v1761 = vunpack.c.l.b16 %v1621
      %v1762 = vunpack.c.l.b16 %v1622
      %v1763 = vunpack.c.l.b16 %v1623
      %v1764 = vunpack.c.l.b16 %v1624
      %v1765 = vunpack.c.l.b16 %v1625
      %v1766 = vunpack.c.l.b16 %v1626
      %v1767 = vpack.c.b16 %v1752, %v1751
      %v1768 = vpack.c.b16 %v1754, %v1753
      %v1769 = vpack.c.b16 %v1756, %v1755
      %v1770 = vpack.c.b16 %v1758, %v1757
      %v1771 = vpack.c.b16 %v1760, %v1759
      %v1772 = vpack.c.b16 %v1762, %v1761
      %v1773 = vpack.c.b16 %v1764, %v1763
      %v1774 = vpack.c.b16 %v1766, %v1765
      %1783 = vmatprep.subr.bf16.mxu0 0
      %1784 = vmatpush1.bf16.msra.mxu0 %v1767
      %1785 = vmatprep.subr.bf16.mxu0 0
      %1786 = vmatpush1.bf16.msra.mxu0 %v1768
      %1787 = vmatprep.subr.bf16.mxu0 0
      %1788 = vmatpush1.bf16.msra.mxu0 %v1769
      %1789 = vmatprep.subr.bf16.mxu0 0
      %1790 = vmatpush1.bf16.msra.mxu0 %v1770
      %1791 = vmatprep.subr.bf16.mxu0 0
      %1792 = vmatpush1.bf16.msra.mxu0 %v1771
      %1793 = vmatprep.subr.bf16.mxu0 0
      %1794 = vmatpush1.bf16.msra.mxu0 %v1772
      %1795 = vmatprep.subr.bf16.mxu0 0
      %1796 = vmatpush1.bf16.msra.mxu0 %v1773
      %1797 = vmatprep.subr.bf16.mxu0 0
      %1798 = vmatpush1.bf16.msra.mxu0 %v1774
      %1799 = vmatprep.subr.bf16.mxu0 0
      %1800 = vmatpush1.bf16.msra.mxu0 0
      %1801 = vmatprep.subr.bf16.mxu0 0
      %1802 = vmatpush1.bf16.msra.mxu0 0
      %1803 = vmatprep.subr.bf16.mxu0 0
      %1804 = vmatpush1.bf16.msra.mxu0 0
      %1805 = vmatprep.subr.bf16.mxu0 0
      %1806 = vmatpush1.bf16.msra.mxu0 0
      %1807 = vmatprep.subr.bf16.mxu0 0
      %1808 = vmatpush1.bf16.msra.mxu0 0
      %1809 = vmatprep.subr.bf16.mxu0 0
      %1810 = vmatpush1.bf16.msra.mxu0 0
      %1811 = vmatprep.subr.bf16.mxu0 0
      %1812 = vmatpush1.bf16.msra.mxu0 0
      %1813 = vmatprep.subr.bf16.mxu0 0
      %1814 = vmatpush1.bf16.msra.mxu0 0
      %1815 = vmatprep.mubr.bf16.mxu0 0
      %1816 = vmatmul.mubr.bf16.gmra.mrb[0].mxu0 %v1610
      %v1817 = vpop.f32.mrb[0].mxu0
      %v1818 = vadd.f32 %v1730, %v1817
      %v1819 = vpop.f32.mrb[0].mxu0
      %v1820 = vpop.f32.mrb[0].mxu0
      %v1821 = vpop.f32.mrb[0].mxu0
      %1822 = vdwg.mxu0
      %s1823 = scalar_lea.vmem [#allocation4], 2
      %v1824 = vld [vmem:[%s1823] ss:$2 sm:$0xf]
      %v1825 = vpack.c.bf16 %v1824, %v1824
      %s1826 = scalar_lea.vmem %s10, 128
      %v1827 = vld [vmem:[%s1826] sm:$0xf]
      %v1828 = vld [vmem:[%s1826 + $0x4] sm:$0xf]
      %v1829 = vld [vmem:[%s1826 + $0x8] sm:$0xf]
      %v1830 = vld [vmem:[%s1826 + $0xc] sm:$0xf]
      %v1831 = vld [vmem:[%s1826 + $0x10] sm:$0xf]
      %v1832 = vld [vmem:[%s1826 + $0x14] sm:$0xf]
      %v1833 = vld [vmem:[%s1826 + $0x18] sm:$0xf]
      %v1834 = vld [vmem:[%s1826 + $0x1c] sm:$0xf]
      %v1835 = vld [vmem:[%s1826 + $0x20] sm:$0xf]
      %v1836 = vld [vmem:[%s1826 + $0x24] sm:$0xf]
      %v1837 = vld [vmem:[%s1826 + $0x28] sm:$0xf]
      %v1838 = vld [vmem:[%s1826 + $0x2c] sm:$0xf]
      %v1839 = vld [vmem:[%s1826 + $0x30] sm:$0xf]
      %v1840 = vld [vmem:[%s1826 + $0x34] sm:$0xf]
      %v1841 = vld [vmem:[%s1826 + $0x38] sm:$0xf]
      %v1842 = vld [vmem:[%s1826 + $0x3c] sm:$0xf]
      %v1859 = vunpack.c.l.b16 %v1827
      %v1860 = vunpack.c.l.b16 %v1828
      %v1861 = vunpack.c.l.b16 %v1829
      %v1862 = vunpack.c.l.b16 %v1830
      %v1863 = vunpack.c.l.b16 %v1831
      %v1864 = vunpack.c.l.b16 %v1832
      %v1865 = vunpack.c.l.b16 %v1833
      %v1866 = vunpack.c.l.b16 %v1834
      %v1867 = vunpack.c.l.b16 %v1835
      %v1868 = vunpack.c.l.b16 %v1836
      %v1869 = vunpack.c.l.b16 %v1837
      %v1870 = vunpack.c.l.b16 %v1838
      %v1871 = vunpack.c.l.b16 %v1839
      %v1872 = vunpack.c.l.b16 %v1840
      %v1873 = vunpack.c.l.b16 %v1841
      %v1874 = vunpack.c.l.b16 %v1842
      %v1875 = vpack.c.b16 %v1860, %v1859
      %v1876 = vpack.c.b16 %v1862, %v1861
      %v1877 = vpack.c.b16 %v1864, %v1863
      %v1878 = vpack.c.b16 %v1866, %v1865
      %v1879 = vpack.c.b16 %v1868, %v1867
      %v1880 = vpack.c.b16 %v1870, %v1869
      %v1881 = vpack.c.b16 %v1872, %v1871
      %v1882 = vpack.c.b16 %v1874, %v1873
      %1891 = vmatprep.subr.bf16.mxu0 0
      %1892 = vmatpush1.bf16.msra.mxu0 %v1875
      %1893 = vmatprep.subr.bf16.mxu0 0
      %1894 = vmatpush1.bf16.msra.mxu0 %v1876
      %1895 = vmatprep.subr.bf16.mxu0 0
      %1896 = vmatpush1.bf16.msra.mxu0 %v1877
      %1897 = vmatprep.subr.bf16.mxu0 0
      %1898 = vmatpush1.bf16.msra.mxu0 %v1878
      %1899 = vmatprep.subr.bf16.mxu0 0
      %1900 = vmatpush1.bf16.msra.mxu0 %v1879
      %1901 = vmatprep.subr.bf16.mxu0 0
      %1902 = vmatpush1.bf16.msra.mxu0 %v1880
      %1903 = vmatprep.subr.bf16.mxu0 0
      %1904 = vmatpush1.bf16.msra.mxu0 %v1881
      %1905 = vmatprep.subr.bf16.mxu0 0
      %1906 = vmatpush1.bf16.msra.mxu0 %v1882
      %1907 = vmatprep.subr.bf16.mxu0 0
      %1908 = vmatpush1.bf16.msra.mxu0 0
      %1909 = vmatprep.subr.bf16.mxu0 0
      %1910 = vmatpush1.bf16.msra.mxu0 0
      %1911 = vmatprep.subr.bf16.mxu0 0
      %1912 = vmatpush1.bf16.msra.mxu0 0
      %1913 = vmatprep.subr.bf16.mxu0 0
      %1914 = vmatpush1.bf16.msra.mxu0 0
      %1915 = vmatprep.subr.bf16.mxu0 0
      %1916 = vmatpush1.bf16.msra.mxu0 0
      %1917 = vmatprep.subr.bf16.mxu0 0
      %1918 = vmatpush1.bf16.msra.mxu0 0
      %1919 = vmatprep.subr.bf16.mxu0 0
      %1920 = vmatpush1.bf16.msra.mxu0 0
      %1921 = vmatprep.subr.bf16.mxu0 0
      %1922 = vmatpush1.bf16.msra.mxu0 0
      %1923 = vmatprep.mubr.bf16.mxu0 0
      %1924 = vmatmul.mubr.bf16.gmra.mrb[0].mxu0 %v1825
      %v1925 = vpop.f32.mrb[0].mxu0
      %v1926 = vadd.f32 0.0, %v1925
      %v1927 = vpop.f32.mrb[0].mxu0
      %v1928 = vpop.f32.mrb[0].mxu0
      %v1929 = vpop.f32.mrb[0].mxu0
      %1930 = vdwg.mxu0
      %v1931 = vadd.f32 %v1818, %v1926
      %v1932 = vld [vmem:[%s11] sm:$0x1]
      %v1934 = vlaneseq
      %v1935 = vshrl.u32 %v1934, 7
      %v1936 = vsub.s32 0, %v1935
      %v1937 = vrot.slane %v1932, %v1936
      %v1939 = vmul.f32 %v1931, %v1937
      %v1940 = vld [vmem:[%s12] sm:$0x1]
      %v1942 = vlaneseq
      %v1943 = vshrl.u32 %v1942, 7
      %v1944 = vsub.s32 0, %v1943
      %v1945 = vrot.slane %v1940, %v1944
      %v1947 = vadd.f32 %v1939, %v1945
      %vm1948 = vcmp.ge.f32.partialorder %v1947, 0.0
      %v1949 = vmul.f32 %v1947, 0.2
      %v1950 = vsel %vm1948, %v1947, %v1949
      %1951 = vst [vmem:[#allocation5] sm:$0xf] %v1950
      %v1952 = vld [vmem:[#allocation5] sm:$0x1]
      %v1953 = vpack.c.bf16 %v1952, %v1952
      %v1954 = vld [vmem:[%s13] sm:$0xf]
      %v1955 = vld [vmem:[%s13 + $0x4] sm:$0xf]
      %v1956 = vld [vmem:[%s13 + $0x8] sm:$0xf]
      %v1957 = vld [vmem:[%s13 + $0xc] sm:$0xf]
      %v1958 = vld [vmem:[%s13 + $0x10] sm:$0xf]
      %v1959 = vld [vmem:[%s13 + $0x14] sm:$0xf]
      %v1960 = vld [vmem:[%s13 + $0x18] sm:$0xf]
      %v1961 = vld [vmem:[%s13 + $0x1c] sm:$0xf]
      %v1962 = vld [vmem:[%s13 + $0x20] sm:$0xf]
      %v1963 = vld [vmem:[%s13 + $0x24] sm:$0xf]
      %v1964 = vld [vmem:[%s13 + $0x28] sm:$0xf]
      %v1965 = vld [vmem:[%s13 + $0x2c] sm:$0xf]
      %v1966 = vld [vmem:[%s13 + $0x30] sm:$0xf]
      %v1967 = vld [vmem:[%s13 + $0x34] sm:$0xf]
      %v1968 = vld [vmem:[%s13 + $0x38] sm:$0xf]
      %v1969 = vld [vmem:[%s13 + $0x3c] sm:$0xf]
      %v1970 = vld [vmem:[#allocation5 + $0x1] sm:$0x1]
      %v1971 = vpack.c.bf16 %v1970, %v1970
      %s1972 = scalar_lea.vmem %s13, 64
      %v1973 = vld [vmem:[%s1972] sm:$0xf]
      %v1974 = vld [vmem:[%s1972 + $0x4] sm:$0xf]
      %v1975 = vld [vmem:[%s1972 + $0x8] sm:$0xf]
      %v1976 = vld [vmem:[%s1972 + $0xc] sm:$0xf]
      %v1977 = vld [vmem:[%s1972 + $0x10] sm:$0xf]
      %v1978 = vld [vmem:[%s1972 + $0x14] sm:$0xf]
      %v1979 = vld [vmem:[%s1972 + $0x18] sm:$0xf]
      %v1980 = vld [vmem:[%s1972 + $0x1c] sm:$0xf]
      %v1981 = vld [vmem:[%s1972 + $0x20] sm:$0xf]
      %v1982 = vld [vmem:[%s1972 + $0x24] sm:$0xf]
      %v1983 = vld [vmem:[%s1972 + $0x28] sm:$0xf]
      %v1984 = vld [vmem:[%s1972 + $0x2c] sm:$0xf]
      %v1985 = vld [vmem:[%s1972 + $0x30] sm:$0xf]
      %v1986 = vld [vmem:[%s1972 + $0x34] sm:$0xf]
      %v1987 = vld [vmem:[%s1972 + $0x38] sm:$0xf]
      %v1988 = vld [vmem:[%s1972 + $0x3c] sm:$0xf]
      %v2005 = vunpack.c.l.b16 %v1973
      %v2006 = vunpack.c.l.b16 %v1974
      %v2007 = vunpack.c.l.b16 %v1975
      %v2008 = vunpack.c.l.b16 %v1976
      %v2009 = vunpack.c.l.b16 %v1977
      %v2010 = vunpack.c.l.b16 %v1978
      %v2011 = vunpack.c.l.b16 %v1979
      %v2012 = vunpack.c.l.b16 %v1980
      %v2013 = vunpack.c.l.b16 %v1981
      %v2014 = vunpack.c.l.b16 %v1982
      %v2015 = vunpack.c.l.b16 %v1983
      %v2016 = vunpack.c.l.b16 %v1984
      %v2017 = vunpack.c.l.b16 %v1985
      %v2018 = vunpack.c.l.b16 %v1986
      %v2019 = vunpack.c.l.b16 %v1987
      %v2020 = vunpack.c.l.b16 %v1988
      %v2021 = vpack.c.b16 %v2006, %v2005
      %v2022 = vpack.c.b16 %v2008, %v2007
      %v2023 = vpack.c.b16 %v2010, %v2009
      %v2024 = vpack.c.b16 %v2012, %v2011
      %v2025 = vpack.c.b16 %v2014, %v2013
      %v2026 = vpack.c.b16 %v2016, %v2015
      %v2027 = vpack.c.b16 %v2018, %v2017
      %v2028 = vpack.c.b16 %v2020, %v2019
      %2037 = vmatprep.subr.bf16.mxu0 0
      %2038 = vmatpush1.bf16.msra.mxu0 %v2021
      %2039 = vmatprep.subr.bf16.mxu0 0
      %2040 = vmatpush1.bf16.msra.mxu0 %v2022
      %2041 = vmatprep.subr.bf16.mxu0 0
      %2042 = vmatpush1.bf16.msra.mxu0 %v2023
      %2043 = vmatprep.subr.bf16.mxu0 0
      %2044 = vmatpush1.bf16.msra.mxu0 %v2024
      %2045 = vmatprep.subr.bf16.mxu0 0
      %2046 = vmatpush1.bf16.msra.mxu0 %v2025
      %2047 = vmatprep.subr.bf16.mxu0 0
      %2048 = vmatpush1.bf16.msra.mxu0 %v2026
      %2049 = vmatprep.subr.bf16.mxu0 0
      %2050 = vmatpush1.bf16.msra.mxu0 %v2027
      %2051 = vmatprep.subr.bf16.mxu0 0
      %2052 = vmatpush1.bf16.msra.mxu0 %v2028
      %2053 = vmatprep.subr.bf16.mxu0 0
      %2054 = vmatpush1.bf16.msra.mxu0 0
      %2055 = vmatprep.subr.bf16.mxu0 0
      %2056 = vmatpush1.bf16.msra.mxu0 0
      %2057 = vmatprep.subr.bf16.mxu0 0
      %2058 = vmatpush1.bf16.msra.mxu0 0
      %2059 = vmatprep.subr.bf16.mxu0 0
      %2060 = vmatpush1.bf16.msra.mxu0 0
      %2061 = vmatprep.subr.bf16.mxu0 0
      %2062 = vmatpush1.bf16.msra.mxu0 0
      %2063 = vmatprep.subr.bf16.mxu0 0
      %2064 = vmatpush1.bf16.msra.mxu0 0
      %2065 = vmatprep.subr.bf16.mxu0 0
      %2066 = vmatpush1.bf16.msra.mxu0 0
      %2067 = vmatprep.subr.bf16.mxu0 0
      %2068 = vmatpush1.bf16.msra.mxu0 0
      %2069 = vmatprep.mubr.bf16.mxu0 0
      %2070 = vmatmul.mubr.bf16.gmra.mrb[0].mxu0 %v1971
      %v2071 = vpop.f32.mrb[0].mxu0
      %v2072 = vadd.f32 0.0, %v2071
      %v2073 = vpop.f32.mrb[0].mxu0
      %v2074 = vpop.f32.mrb[0].mxu0
      %v2075 = vpop.f32.mrb[0].mxu0
      %2076 = vdwg.mxu0
      %v2093 = vunpack.c.l.b16 %v1954
      %v2094 = vunpack.c.l.b16 %v1955
      %v2095 = vunpack.c.l.b16 %v1956
      %v2096 = vunpack.c.l.b16 %v1957
      %v2097 = vunpack.c.l.b16 %v1958
      %v2098 = vunpack.c.l.b16 %v1959
      %v2099 = vunpack.c.l.b16 %v1960
      %v2100 = vunpack.c.l.b16 %v1961
      %v2101 = vunpack.c.l.b16 %v1962
      %v2102 = vunpack.c.l.b16 %v1963
      %v2103 = vunpack.c.l.b16 %v1964
      %v2104 = vunpack.c.l.b16 %v1965
      %v2105 = vunpack.c.l.b16 %v1966
      %v2106 = vunpack.c.l.b16 %v1967
      %v2107 = vunpack.c.l.b16 %v1968
      %v2108 = vunpack.c.l.b16 %v1969
      %v2109 = vpack.c.b16 %v2094, %v2093
      %v2110 = vpack.c.b16 %v2096, %v2095
      %v2111 = vpack.c.b16 %v2098, %v2097
      %v2112 = vpack.c.b16 %v2100, %v2099
      %v2113 = vpack.c.b16 %v2102, %v2101
      %v2114 = vpack.c.b16 %v2104, %v2103
      %v2115 = vpack.c.b16 %v2106, %v2105
      %v2116 = vpack.c.b16 %v2108, %v2107
      %2125 = vmatprep.subr.bf16.mxu0 0
      %2126 = vmatpush1.bf16.msra.mxu0 %v2109
      %2127 = vmatprep.subr.bf16.mxu0 0
      %2128 = vmatpush1.bf16.msra.mxu0 %v2110
      %2129 = vmatprep.subr.bf16.mxu0 0
      %2130 = vmatpush1.bf16.msra.mxu0 %v2111
      %2131 = vmatprep.subr.bf16.mxu0 0
      %2132 = vmatpush1.bf16.msra.mxu0 %v2112
      %2133 = vmatprep.subr.bf16.mxu0 0
      %2134 = vmatpush1.bf16.msra.mxu0 %v2113
      %2135 = vmatprep.subr.bf16.mxu0 0
      %2136 = vmatpush1.bf16.msra.mxu0 %v2114
      %2137 = vmatprep.subr.bf16.mxu0 0
      %2138 = vmatpush1.bf16.msra.mxu0 %v2115
      %2139 = vmatprep.subr.bf16.mxu0 0
      %2140 = vmatpush1.bf16.msra.mxu0 %v2116
      %2141 = vmatprep.subr.bf16.mxu0 0
      %2142 = vmatpush1.bf16.msra.mxu0 0
      %2143 = vmatprep.subr.bf16.mxu0 0
      %2144 = vmatpush1.bf16.msra.mxu0 0
      %2145 = vmatprep.subr.bf16.mxu0 0
      %2146 = vmatpush1.bf16.msra.mxu0 0
      %2147 = vmatprep.subr.bf16.mxu0 0
      %2148 = vmatpush1.bf16.msra.mxu0 0
      %2149 = vmatprep.subr.bf16.mxu0 0
      %2150 = vmatpush1.bf16.msra.mxu0 0
      %2151 = vmatprep.subr.bf16.mxu0 0
      %2152 = vmatpush1.bf16.msra.mxu0 0
      %2153 = vmatprep.subr.bf16.mxu0 0
      %2154 = vmatpush1.bf16.msra.mxu0 0
      %2155 = vmatprep.subr.bf16.mxu0 0
      %2156 = vmatpush1.bf16.msra.mxu0 0
      %2157 = vmatprep.mubr.bf16.mxu0 0
      %2158 = vmatmul.mubr.bf16.gmra.mrb[0].mxu0 %v1953
      %v2159 = vpop.f32.mrb[0].mxu0
      %v2160 = vadd.f32 %v2072, %v2159
      %v2161 = vpop.f32.mrb[0].mxu0
      %v2162 = vpop.f32.mrb[0].mxu0
      %v2163 = vpop.f32.mrb[0].mxu0
      %2164 = vdwg.mxu0
      %v2165 = vld [vmem:[#allocation5 + $0x2] sm:$0x1]
      %v2166 = vpack.c.bf16 %v2165, %v2165
      %s2167 = scalar_lea.vmem %s13, 128
      %v2168 = vld [vmem:[%s2167] sm:$0xf]
      %v2169 = vld [vmem:[%s2167 + $0x4] sm:$0xf]
      %v2170 = vld [vmem:[%s2167 + $0x8] sm:$0xf]
      %v2171 = vld [vmem:[%s2167 + $0xc] sm:$0xf]
      %v2172 = vld [vmem:[%s2167 + $0x10] sm:$0xf]
      %v2173 = vld [vmem:[%s2167 + $0x14] sm:$0xf]
      %v2174 = vld [vmem:[%s2167 + $0x18] sm:$0xf]
      %v2175 = vld [vmem:[%s2167 + $0x1c] sm:$0xf]
      %v2176 = vld [vmem:[%s2167 + $0x20] sm:$0xf]
      %v2177 = vld [vmem:[%s2167 + $0x24] sm:$0xf]
      %v2178 = vld [vmem:[%s2167 + $0x28] sm:$0xf]
      %v2179 = vld [vmem:[%s2167 + $0x2c] sm:$0xf]
      %v2180 = vld [vmem:[%s2167 + $0x30] sm:$0xf]
      %v2181 = vld [vmem:[%s2167 + $0x34] sm:$0xf]
      %v2182 = vld [vmem:[%s2167 + $0x38] sm:$0xf]
      %v2183 = vld [vmem:[%s2167 + $0x3c] sm:$0xf]
      %v2200 = vunpack.c.l.b16 %v2168
      %v2201 = vunpack.c.l.b16 %v2169
      %v2202 = vunpack.c.l.b16 %v2170
      %v2203 = vunpack.c.l.b16 %v2171
      %v2204 = vunpack.c.l.b16 %v2172
      %v2205 = vunpack.c.l.b16 %v2173
      %v2206 = vunpack.c.l.b16 %v2174
      %v2207 = vunpack.c.l.b16 %v2175
      %v2208 = vunpack.c.l.b16 %v2176
      %v2209 = vunpack.c.l.b16 %v2177
      %v2210 = vunpack.c.l.b16 %v2178
      %v2211 = vunpack.c.l.b16 %v2179
      %v2212 = vunpack.c.l.b16 %v2180
      %v2213 = vunpack.c.l.b16 %v2181
      %v2214 = vunpack.c.l.b16 %v2182
      %v2215 = vunpack.c.l.b16 %v2183
      %v2216 = vpack.c.b16 %v2201, %v2200
      %v2217 = vpack.c.b16 %v2203, %v2202
      %v2218 = vpack.c.b16 %v2205, %v2204
      %v2219 = vpack.c.b16 %v2207, %v2206
      %v2220 = vpack.c.b16 %v2209, %v2208
      %v2221 = vpack.c.b16 %v2211, %v2210
      %v2222 = vpack.c.b16 %v2213, %v2212
      %v2223 = vpack.c.b16 %v2215, %v2214
      %2232 = vmatprep.subr.bf16.mxu0 0
      %2233 = vmatpush1.bf16.msra.mxu0 %v2216
      %2234 = vmatprep.subr.bf16.mxu0 0
      %2235 = vmatpush1.bf16.msra.mxu0 %v2217
      %2236 = vmatprep.subr.bf16.mxu0 0
      %2237 = vmatpush1.bf16.msra.mxu0 %v2218
      %2238 = vmatprep.subr.bf16.mxu0 0
      %2239 = vmatpush1.bf16.msra.mxu0 %v2219
      %2240 = vmatprep.subr.bf16.mxu0 0
      %2241 = vmatpush1.bf16.msra.mxu0 %v2220
      %2242 = vmatprep.subr.bf16.mxu0 0
      %2243 = vmatpush1.bf16.msra.mxu0 %v2221
      %2244 = vmatprep.subr.bf16.mxu0 0
      %2245 = vmatpush1.bf16.msra.mxu0 %v2222
      %2246 = vmatprep.subr.bf16.mxu0 0
      %2247 = vmatpush1.bf16.msra.mxu0 %v2223
      %2248 = vmatprep.subr.bf16.mxu0 0
      %2249 = vmatpush1.bf16.msra.mxu0 0
      %2250 = vmatprep.subr.bf16.mxu0 0
      %2251 = vmatpush1.bf16.msra.mxu0 0
      %2252 = vmatprep.subr.bf16.mxu0 0
      %2253 = vmatpush1.bf16.msra.mxu0 0
      %2254 = vmatprep.subr.bf16.mxu0 0
      %2255 = vmatpush1.bf16.msra.mxu0 0
      %2256 = vmatprep.subr.bf16.mxu0 0
      %2257 = vmatpush1.bf16.msra.mxu0 0
      %2258 = vmatprep.subr.bf16.mxu0 0
      %2259 = vmatpush1.bf16.msra.mxu0 0
      %2260 = vmatprep.subr.bf16.mxu0 0
      %2261 = vmatpush1.bf16.msra.mxu0 0
      %2262 = vmatprep.subr.bf16.mxu0 0
      %2263 = vmatpush1.bf16.msra.mxu0 0
      %2264 = vmatprep.mubr.bf16.mxu0 0
      %2265 = vmatmul.mubr.bf16.gmra.mrb[0].mxu0 %v2166
      %v2266 = vpop.f32.mrb[0].mxu0
      %v2267 = vadd.f32 0.0, %v2266
      %v2268 = vpop.f32.mrb[0].mxu0
      %v2269 = vpop.f32.mrb[0].mxu0
      %v2270 = vpop.f32.mrb[0].mxu0
      %2271 = vdwg.mxu0
      %v2272 = vadd.f32 %v2160, %v2267
      %v2273 = vld [vmem:[#allocation5 + $0x3] sm:$0x1]
      %v2274 = vpack.c.bf16 %v2273, %v2273
      %s2275 = scalar_lea.vmem %s13, 192
      %v2276 = vld [vmem:[%s2275] sm:$0xf]
      %v2277 = vld [vmem:[%s2275 + $0x4] sm:$0xf]
      %v2278 = vld [vmem:[%s2275 + $0x8] sm:$0xf]
      %v2279 = vld [vmem:[%s2275 + $0xc] sm:$0xf]
      %v2280 = vld [vmem:[%s2275 + $0x10] sm:$0xf]
      %v2281 = vld [vmem:[%s2275 + $0x14] sm:$0xf]
      %v2282 = vld [vmem:[%s2275 + $0x18] sm:$0xf]
      %v2283 = vld [vmem:[%s2275 + $0x1c] sm:$0xf]
      %v2284 = vld [vmem:[%s2275 + $0x20] sm:$0xf]
      %v2285 = vld [vmem:[%s2275 + $0x24] sm:$0xf]
      %v2286 = vld [vmem:[%s2275 + $0x28] sm:$0xf]
      %v2287 = vld [vmem:[%s2275 + $0x2c] sm:$0xf]
      %v2288 = vld [vmem:[%s2275 + $0x30] sm:$0xf]
      %v2289 = vld [vmem:[%s2275 + $0x34] sm:$0xf]
      %v2290 = vld [vmem:[%s2275 + $0x38] sm:$0xf]
      %v2291 = vld [vmem:[%s2275 + $0x3c] sm:$0xf]
      %v2308 = vunpack.c.l.b16 %v2276
      %v2309 = vunpack.c.l.b16 %v2277
      %v2310 = vunpack.c.l.b16 %v2278
      %v2311 = vunpack.c.l.b16 %v2279
      %v2312 = vunpack.c.l.b16 %v2280
      %v2313 = vunpack.c.l.b16 %v2281
      %v2314 = vunpack.c.l.b16 %v2282
      %v2315 = vunpack.c.l.b16 %v2283
      %v2316 = vunpack.c.l.b16 %v2284
      %v2317 = vunpack.c.l.b16 %v2285
      %v2318 = vunpack.c.l.b16 %v2286
      %v2319 = vunpack.c.l.b16 %v2287
      %v2320 = vunpack.c.l.b16 %v2288
      %v2321 = vunpack.c.l.b16 %v2289
      %v2322 = vunpack.c.l.b16 %v2290
      %v2323 = vunpack.c.l.b16 %v2291
      %v2324 = vpack.c.b16 %v2309, %v2308
      %v2325 = vpack.c.b16 %v2311, %v2310
      %v2326 = vpack.c.b16 %v2313, %v2312
      %v2327 = vpack.c.b16 %v2315, %v2314
      %v2328 = vpack.c.b16 %v2317, %v2316
      %v2329 = vpack.c.b16 %v2319, %v2318
      %v2330 = vpack.c.b16 %v2321, %v2320
      %v2331 = vpack.c.b16 %v2323, %v2322
      %2340 = vmatprep.subr.bf16.mxu0 0
      %2341 = vmatpush1.bf16.msra.mxu0 %v2324
      %2342 = vmatprep.subr.bf16.mxu0 0
      %2343 = vmatpush1.bf16.msra.mxu0 %v2325
      %2344 = vmatprep.subr.bf16.mxu0 0
      %2345 = vmatpush1.bf16.msra.mxu0 %v2326
      %2346 = vmatprep.subr.bf16.mxu0 0
      %2347 = vmatpush1.bf16.msra.mxu0 %v2327
      %2348 = vmatprep.subr.bf16.mxu0 0
      %2349 = vmatpush1.bf16.msra.mxu0 %v2328
      %2350 = vmatprep.subr.bf16.mxu0 0
      %2351 = vmatpush1.bf16.msra.mxu0 %v2329
      %2352 = vmatprep.subr.bf16.mxu0 0
      %2353 = vmatpush1.bf16.msra.mxu0 %v2330
      %2354 = vmatprep.subr.bf16.mxu0 0
      %2355 = vmatpush1.bf16.msra.mxu0 %v2331
      %2356 = vmatprep.subr.bf16.mxu0 0
      %2357 = vmatpush1.bf16.msra.mxu0 0
      %2358 = vmatprep.subr.bf16.mxu0 0
      %2359 = vmatpush1.bf16.msra.mxu0 0
      %2360 = vmatprep.subr.bf16.mxu0 0
      %2361 = vmatpush1.bf16.msra.mxu0 0
      %2362 = vmatprep.subr.bf16.mxu0 0
      %2363 = vmatpush1.bf16.msra.mxu0 0
      %2364 = vmatprep.subr.bf16.mxu0 0
      %2365 = vmatpush1.bf16.msra.mxu0 0
      %2366 = vmatprep.subr.bf16.mxu0 0
      %2367 = vmatpush1.bf16.msra.mxu0 0
      %2368 = vmatprep.subr.bf16.mxu0 0
      %2369 = vmatpush1.bf16.msra.mxu0 0
      %2370 = vmatprep.subr.bf16.mxu0 0
      %2371 = vmatpush1.bf16.msra.mxu0 0
      %2372 = vmatprep.mubr.bf16.mxu0 0
      %2373 = vmatmul.mubr.bf16.gmra.mrb[0].mxu0 %v2274
      %v2374 = vpop.f32.mrb[0].mxu0
      %v2375 = vadd.f32 0.0, %v2374
      %v2376 = vpop.f32.mrb[0].mxu0
      %v2377 = vpop.f32.mrb[0].mxu0
      %v2378 = vpop.f32.mrb[0].mxu0
      %2379 = vdwg.mxu0
      %v2380 = vadd.f32 %v2272, %v2375
      %v2381 = vld [vmem:[%s14] sm:$0x1]
      %v2382 = vadd.f32 %v2380, %v2381
      %vm2383 = vcmp.ge.f32.partialorder %v2382, 0.0
      %v2384 = vmul.f32 %v2382, 0.2
      %v2385 = vsel %vm2383, %v2382, %v2384
      %v2386 = vld [vmem:[%s15] sm:$0x1]
      %v2387 = vmul.f32 %v2385, %v2386
      %vm2388 = vcmask 1040384
      %v2389 = vsel %vm2388, %v2387, 0.0
      %2390 = vadd.xlane.f32.xlu0 %v2389
      %v2391 = vpop.xlane.xlu0 %2390
      %v2392 = vld [vmem:[#allocation6] sm:$0x1]
      %v2393 = vadd.f32 %v2391, %v2392
      %2395 = vset.pattern.permute.xlu0 0
      %2396 = vperm.xlu0 %2395, %v2393
      %v2397 = vpop.permute.xlu0 %2396
      %2399 = vst [vmem:[%s546] sm:$0x1] %v2397
      %p2400 = scmp.lt.s32.totalorder %s30, 1
      %s2401 = scalar_select %p2400, %s30, 1
      %s2402 = scalar_lea.vmem %s17, %s2401
      // Predicated region
      $region89: #{vgg_style_discriminator_1d.1} parent=87 // pred_check
        %p2403 = pneg %p410
      $region90: #{vgg_style_discriminator_1d.1} parent=87 // pred_check_branch
        %2405 = sbr.rel (%p2403) target = $region92
      $region91: #{vgg_style_discriminator_1d.1} parent=87 // pred_region
        _
      $region92: #{vgg_style_discriminator_1d.1} parent=87 // pred_fallthru
        _
    $region88: #{vgg_style_discriminator_1d.1} parent=5 // pred_fallthru
      _
    %p2406 = scmp.le.s32.totalorder 2, %s25
    // Predicated region
    $region93: #{vgg_style_discriminator_1d.1} parent=5 // pred_check
      %p2407 = pneg %p2406
    $region94: #{vgg_style_discriminator_1d.1} parent=5 // pred_check_branch
      %2409 = sbr.rel (%p2407) target = $region96
    $region95: #{vgg_style_discriminator_1d.1} parent=5 // pred_region
      %s2410 = ssub.s32 %s25, 2
      // Predicated region
      $region97: #{vgg_style_discriminator_1d.1} parent=95 // pred_check
        %p2411 = pneg %p416
      $region98: #{vgg_style_discriminator_1d.1} parent=95 // pred_check_branch
        %2413 = sbr.rel (%p2411) target = $region100
      $region99: #{vgg_style_discriminator_1d.1} parent=95 // pred_region
        %p2414 = scmp.lt.s32.totalorder %s31, 1
        %s2415 = scalar_select %p2414, %s31, 1
        %s2416 = scalar_lea.vmem %s17, %s2415
      $region100: #{vgg_style_discriminator_1d.1} parent=95 // pred_fallthru
        _
    $region96: #{vgg_style_discriminator_1d.1} parent=5 // pred_fallthru
      _
  $region6: #{vgg_style_discriminator_1d.1} parent=0 // loop_footer
    %s29 = sadd.s32 1, %s25
  $region7: #{vgg_style_discriminator_1d.1} parent=0 // loop_footer_branch
    %24 = sbr.rel target = $region3
  $region8: #{vgg_style_discriminator_1d.1} parent=0 // loop_exit
    _

</llo_original>
